<compile_context>
chip_gen: v7x
topology: tpu7x:2x2x1
jax: 0.10.0
libtpu: 0.0.40
codegen_flags: <defaults>
</compile_context>

<pallas_src>
import numpy as np
import jax
import jax.numpy as jnp
from jax.experimental import pallas as pl
from jax.experimental.pallas import tpu as pltpu


# ------------------------------ small helpers -------------------------------

def _round_up(x, m):
    return (x + m - 1) // m * m


def _elu(x):
    # torch.nn.ELU(alpha=1.0).  Inactive branch clamped so exp() never
    # overflows; exp(x)-1 vs expm1(x) only differs by f32 rounding near 0.
    return jnp.where(x > 0.0, x, jnp.exp(jnp.minimum(x, 0.0)) - 1.0)


# ------------------------------ fused kernel --------------------------------

def _make_fused_kernel(dec_has_norm, eps):
    """Build the fused forward kernel.

    Ref order: x, encoder (w1,b1,w2,b2,w3,b3), then per decoder layer
      - norm layer :  M(bf16), P_gather(bf16), P_scatter(bf16),
                      gamma_flat(f32), beta_flat(f32)
      - final layer:  M(bf16), bias_flat(f32)
    followed by the single output ref.
    """

    def _mm(a, w_ref):
        # Explicit bf16 operands, f32 accumulate on the MXU (single pass).
        return jnp.dot(a.astype(jnp.bfloat16), w_ref[...],
                       preferred_element_type=jnp.float32)

    def kernel(*refs):
        x_ref = refs[0]
        w1, b1, w2, b2, w3, b3 = refs[1:7]
        out_ref = refs[-1]

        # ----- encoder MLP: Linear -> ELU -> Linear -> ELU -> Linear -----
        # TODO(synk): K=N=32 encoder matmuls use 32/128 lanes; acceptable at
        # these sizes (pad hidden dims to 128 only if the encoder grows).
        h = _elu(_mm(x_ref[...], w1) + b1[...])
        h = _elu(_mm(h, w2) + b2[...])
        h = _mm(h, w3) + b3[...]

        # ----- deconv stack (ConvTranspose2d folded to dense matmuls) -----
        idx = 7
        for has_norm in dec_has_norm:
            if has_norm:
                m_ref, pg_ref, ps_ref, g_ref, be_ref = refs[idx:idx + 5]
                idx += 5
                y = _mm(h, m_ref)                    # ConvT (no bias), f32
                # Per-pixel channel LayerNorm, kept lane-dense.
                #   gather : [tb, HW*C] x [HW*C, HWp] -> per-pixel stats
                #   scatter: [tb, HWp]  x [HWp, HW*C] -> broadcast to lanes
                # All four matmuls are intentionally bf16 (1/C and 1.0 are
                # exact in bf16; mu/inv pass through bf16 -> ~0.4% LN error,
                # acceptable for inference vs. the f32 torch reference).
                mu_pix = _mm(y, pg_ref)              # E[y] per pixel
                mu = _mm(mu_pix, ps_ref)             # broadcast mean
                d = y - mu
                var_pix = _mm(d * d, pg_ref)         # two-pass variance
                inv_pix = jax.lax.rsqrt(var_pix + eps)
                inv = _mm(inv_pix, ps_ref)           # broadcast 1/std
                h = _elu((d * inv) * g_ref[...] + be_ref[...])
            else:
                m_ref, bias_ref = refs[idx:idx + 2]
                idx += 2
                h = _mm(h, m_ref) + bias_ref[...]    # final ConvT + bias
        out_ref[...] = h

    return kernel


# --------------------------- host-side weight prep --------------------------

def _convT_dense_matrix(w, h_in, w_in, h_out, w_out, stride, pad_h, pad_w):
    """Fold ConvTranspose2d(weight=[Cin,Cout,KH,KW], stride, pad) into a dense
    matrix mapping NHWC-flat input [Hin*Win*Cin] -> NHWC-flat output
    [Hout*Wout*Cout].  (output_padding only changes Hout/Wout, passed in.)"""
    c_in, c_out, kh_n, kw_n = w.shape
    m = np.zeros((h_in * w_in * c_in, h_out * w_out * c_out), dtype=np.float32)
    for ih in range(h_in):
        for iw in range(w_in):
            for kh in range(kh_n):
                oh = ih * stride - pad_h + kh
                if oh < 0 or oh >= h_out:
                    continue
                for kw in range(kw_n):
                    ow = iw * stride - pad_w + kw
                    if ow < 0 or ow >= w_out:
                        continue
                    r = (ih * w_in + iw) * c_in
                    c = (oh * w_out + ow) * c_out
                    m[r:r + c_in, c:c + c_out] += w[:, :, kh, kw]
    return m


def _pixel_gather_matrix(hw, c):
    """[hw*c, hw_pad] matrix: column `pix` averages that pixel's c lanes.
    Entries are 1/c (exact in bf16 for power-of-two c)."""
    hw_pad = _round_up(max(hw, 1), 128)          # lane-dense output width
    g = np.zeros((hw * c, hw_pad), dtype=np.float32)
    for pix in range(hw):
        g[pix * c:(pix + 1) * c, pix] = 1.0 / c
    return g


def _pixel_scatter_matrix(hw, c):
    """[hw_pad, hw*c] matrix: row `pix` broadcasts to that pixel's c lanes."""
    hw_pad = _round_up(max(hw, 1), 128)
    s = np.zeros((hw_pad, hw * c), dtype=np.float32)
    for pix in range(hw):
        s[pix, pix * c:(pix + 1) * c] = 1.0
    return s


class DepthPredictorPallas:
    """JAX/Pallas re-implementation of rsl_rl DepthPredictor.forward."""

    def __init__(self, forward_heightmap_dim=25, prop_dim=7,
                 depth_image_dims=(16, 16), encoder_hidden_dims=(32, 32),
                 depth=8, norm=True, kernel_size=4, minres=4,
                 cnn_sigmoid=False, seed=0, batch_tile=512, eps=1e-3):
        # eps=1e-3 matches ImgChLayerNorm's default (nn.LayerNorm(ch, eps=0.001)).
        assert norm, "only norm=True is implemented"
        assert len(encoder_hidden_dims) == 2, "encoder fused for 2 hidden layers"

        # --- replicate the PyTorch __init__ shape bookkeeping ---
        h, w = depth_image_dims
        stages = int(np.log2(w) - np.log2(minres))
        h_list, w_list = [], []
        for _ in range(stages):
            h, w = (h + 1) // 2, (w + 1) // 2
            h_list.append(h)
            w_list.append(w)
        h_list = h_list[::-1]
        w_list = w_list[::-1]
        h_list.append(depth_image_dims[0])
        w_list.append(depth_image_dims[1])
        self.h_list, self.w_list = h_list, w_list
        self._cnn_sigmoid = cnn_sigmoid
        # batch_tile 512 keeps per-tile activation temporaries at a few MB,
        # safely inside v7x's 64 MiB VMEM (and trivially inside v5e/v6e).
        self._batch_tile = batch_tile

        layer_num = len(h_list) - 1
        out_ch = h_list[0] * w_list[0] * depth * 2 ** (len(h_list) - 2)
        self._embed_size = out_ch
        in_dim = out_ch // (h_list[0] * w_list[0])
        out_dim = in_dim // 2

        rng = np.random.default_rng(seed)
        f32, bf16 = np.float32, jnp.bfloat16

        # ------------------ encoder MLP weights (bf16 W, f32 b) -------------
        d_in = forward_heightmap_dim + prop_dim
        dims = [d_in, encoder_hidden_dims[0], encoder_hidden_dims[1],
                self._embed_size]
        enc_args = []
        for a, b in zip(dims[:-1], dims[1:]):
            wt = (rng.standard_normal((a, b)) / np.sqrt(a)).astype(f32)
            bi = (0.01 * rng.standard_normal((1, b))).astype(f32)
            enc_args += [jnp.asarray(wt).astype(bf16), jnp.asarray(bi)]

        # ------------------ ConvTranspose2d decoder -------------------------
        # TODO(synk): tools.weight_init / uniform_weight_init not reproduced;
        # weights are synthetic deterministic values of the correct shapes.
        dec_args, dec_has_norm = [], []
        cur_in, cur_out = in_dim, out_dim
        for i in range(layer_num):
            has_bias, use_act_norm = False, True
            if i == layer_num - 1:
                cur_out, has_bias, use_act_norm = 1, True, False
            if i != 0:
                cur_in = 2 ** (layer_num - (i - 1) - 2) * depth
            pad_h = 1 if h_list[i] * 2 == h_list[i + 1] else 2
            pad_w = 1 if w_list[i] * 2 == w_list[i + 1] else 2
            h_in, w_in = h_list[i], w_list[i]
            h_out, w_out = h_list[i + 1], w_list[i + 1]

            wt = (rng.standard_normal((cur_in, cur_out, kernel_size, kernel_size))
                  / np.sqrt(cur_in * kernel_size * kernel_size)).astype(f32)
            m = _convT_dense_matrix(wt, h_in, w_in, h_out, w_out, 2, pad_h, pad_w)
            dec_args.append(jnp.asarray(m).astype(bf16))
            dec_has_norm.append(use_act_norm)
            if use_act_norm:
                hw = h_out * w_out
                dec_args.append(jnp.asarray(_pixel_gather_matrix(hw, cur_out)
                                            ).astype(bf16))
                dec_args.append(jnp.asarray(_pixel_scatter_matrix(hw, cur_out)
                                            ).astype(bf16))
                gamma = np.ones((cur_out,), dtype=f32)     # LayerNorm defaults
                beta = np.zeros((cur_out,), dtype=f32)
                dec_args.append(jnp.asarray(np.tile(gamma, hw)[None, :]))
                dec_args.append(jnp.asarray(np.tile(beta, hw)[None, :]))
            else:
                if has_bias:
                    b_ch = (0.01 * rng.standard_normal((cur_out,))).astype(f32)
                else:
                    b_ch = np.zeros((cur_out,), dtype=f32)
                dec_args.append(jnp.asarray(np.tile(b_ch, h_out * w_out)[None, :]))
            cur_in = cur_out
            cur_out //= 2

        self._weight_args = tuple(enc_args) + tuple(dec_args)
        self._out_flat = h_list[-1] * w_list[-1] * 1
        self._kernel = _make_fused_kernel(tuple(dec_has_norm), eps)
        # TODO(synk): at much larger depth_image_dims/depth the folded ConvT
        # matrices outgrow VMEM (esp. v7x 64 MiB); that config needs a
        # K/N-tiled matmul path with an f32 VMEM accumulator.
        self._forward_jit = jax.jit(self._forward)

    # ------------------------------ forward ---------------------------------

    def _forward(self, forward_heightmap, prop):
        x = jnp.concatenate([forward_heightmap, prop], axis=-1).astype(jnp.float32)
        batch, d_in = x.shape

        # Batch tiling: rows multiple of 8.  Aim for >= 2 tiles whenever the
        # batch permits so ("parallel",) splits across both TensorCores on
        # v7x; the extra grid step costs ~0.35us on single-TC chips.
        b8 = _round_up(batch, 8)
        if b8 >= 16:
            half = _round_up(-(-b8 // 2), 8)
            tb = min(self._batch_tile, half)
        else:
            tb = b8
        b_pad = _round_up(b8, tb)
        if b_pad != batch:
            x = jnp.pad(x, ((0, b_pad - batch), (0, 0)))

        # Weights use constant block indices (VMEM-resident across batch
        # tiles) and are single-buffered -> no redundant double buffer.
        in_specs = [pl.BlockSpec((tb, d_in), lambda i: (i, 0))]
        in_specs += [pl.BlockSpec(w.shape, lambda i: (0, 0),
                                  pipeline_mode=pl.Buffered(1))
                     for w in self._weight_args]
        out_specs = pl.BlockSpec((tb, self._out_flat), lambda i: (i, 0))

        y = pl.pallas_call(
            self._kernel,
            out_shape=jax.ShapeDtypeStruct((b_pad, self._out_flat), jnp.float32),
            grid=(b_pad // tb,),
            in_specs=in_specs,
            out_specs=out_specs,
            compiler_params=pltpu.CompilerParams(
                dimension_semantics=("parallel",),        # 2 TCs on v7x
                vmem_limit_bytes=64 * 1024 * 1024),       # explicit scoped limit
        )(x, *self._weight_args)

        # final torch permute(0,2,3,1): NHWC-flat -> [B, H, W, 1]
        mean = y[:batch].reshape(batch, self.h_list[-1], self.w_list[-1], 1)
        if self._cnn_sigmoid:
            mean = jax.nn.sigmoid(mean)
        return mean

    def __call__(self, forward_heightmap, prop):
        return self._forward_jit(forward_heightmap, prop)


# ----------------------------------- main ------------------------------------

if __name__ == "__main__":
    # small shapes consistent with the module:
    #   forward_heightmap_dim=25, prop_dim=7, depth_image_dims=16x16,
    #   encoder_hidden_dims=[32,32], depth=8, minres=4  -> 2 deconv stages
    model = DepthPredictorPallas(
        forward_heightmap_dim=25, prop_dim=7,
        depth_image_dims=(16, 16), encoder_hidden_dims=(32, 32),
        depth=8, kernel_size=4, minres=4, seed=0)

    key = jax.random.PRNGKey(0)
    k1, k2 = jax.random.split(key)
    forward_heightmap = jax.random.normal(k1, (2, 25), dtype=jnp.float32)
    prop = jax.random.normal(k2, (2, 7), dtype=jnp.float32)

    out = model(forward_heightmap, prop)
    out = jax.block_until_ready(out)

    assert out.shape == (2, 16, 16, 1), out.shape
    assert bool(jnp.all(jnp.isfinite(out)))
    print("KERNEL_OK")
</pallas_src>

<mosaic_0001>
module attributes {stable_mosaic.version = 11 : i64} {
  func.func @kernel(%arg0: i32, %arg1: memref<8x32xf32, #tpu.memory_space<vmem>>, %arg2: memref<32x32xbf16, #tpu.memory_space<vmem>>, %arg3: memref<1x32xf32, #tpu.memory_space<vmem>>, %arg4: memref<32x32xbf16, #tpu.memory_space<vmem>>, %arg5: memref<1x32xf32, #tpu.memory_space<vmem>>, %arg6: memref<32x256xbf16, #tpu.memory_space<vmem>>, %arg7: memref<1x256xf32, #tpu.memory_space<vmem>>, %arg8: memref<256x512xbf16, #tpu.memory_space<vmem>>, %arg9: memref<512x128xbf16, #tpu.memory_space<vmem>>, %arg10: memref<128x512xbf16, #tpu.memory_space<vmem>>, %arg11: memref<1x512xf32, #tpu.memory_space<vmem>>, %arg12: memref<1x512xf32, #tpu.memory_space<vmem>>, %arg13: memref<512x256xbf16, #tpu.memory_space<vmem>>, %arg14: memref<1x256xf32, #tpu.memory_space<vmem>>, %arg15: memref<8x256xf32, #tpu.memory_space<vmem>>) attributes {dimension_semantics = [#tpu.dimension_semantics<parallel>], iteration_bounds = array<i64: 1>, scalar_prefetch = 0 : i64, scratch_operands = 0 : i64, tpu.core_type = #tpu.core_type<tc>, window_params = [{transform_indices = @transform_0, window_bounds = array<i64: 8, 32>}, {pipeline_mode = #tpu.pipeline_mode<synchronous>, transform_indices = @transform_1, window_bounds = array<i64: 32, 32>}, {pipeline_mode = #tpu.pipeline_mode<synchronous>, transform_indices = @transform_2, window_bounds = array<i64: 1, 32>}, {pipeline_mode = #tpu.pipeline_mode<synchronous>, transform_indices = @transform_3, window_bounds = array<i64: 32, 32>}, {pipeline_mode = #tpu.pipeline_mode<synchronous>, transform_indices = @transform_4, window_bounds = array<i64: 1, 32>}, {pipeline_mode = #tpu.pipeline_mode<synchronous>, transform_indices = @transform_5, window_bounds = array<i64: 32, 256>}, {pipeline_mode = #tpu.pipeline_mode<synchronous>, transform_indices = @transform_6, window_bounds = array<i64: 1, 256>}, {pipeline_mode = #tpu.pipeline_mode<synchronous>, transform_indices = @transform_7, window_bounds = array<i64: 256, 512>}, {pipeline_mode = #tpu.pipeline_mode<synchronous>, transform_indices = @transform_8, window_bounds = array<i64: 512, 128>}, {pipeline_mode = #tpu.pipeline_mode<synchronous>, transform_indices = @transform_9, window_bounds = array<i64: 128, 512>}, {pipeline_mode = #tpu.pipeline_mode<synchronous>, transform_indices = @transform_10, window_bounds = array<i64: 1, 512>}, {pipeline_mode = #tpu.pipeline_mode<synchronous>, transform_indices = @transform_11, window_bounds = array<i64: 1, 512>}, {pipeline_mode = #tpu.pipeline_mode<synchronous>, transform_indices = @transform_12, window_bounds = array<i64: 512, 256>}, {pipeline_mode = #tpu.pipeline_mode<synchronous>, transform_indices = @transform_13, window_bounds = array<i64: 1, 256>}, {transform_indices = @transform_14, window_bounds = array<i64: 8, 256>}]} {
    %c0 = arith.constant 0 : index
    %c0_0 = arith.constant 0 : index
    %0 = vector.load %arg1[%c0, %c0_0] : memref<8x32xf32, #tpu.memory_space<vmem>>, vector<8x32xf32>
    %1 = arith.truncf %0 : vector<8x32xf32> to vector<8x32xbf16>
    %c0_1 = arith.constant 0 : index
    %c0_2 = arith.constant 0 : index
    %2 = vector.load %arg2[%c0_1, %c0_2] : memref<32x32xbf16, #tpu.memory_space<vmem>>, vector<32x32xbf16>
    %cst = arith.constant dense<0.000000e+00> : vector<8x32xf32>
    %3 = tpu.matmul %1, %2, %cst {dimension_numbers = #tpu.dot_dimension_numbers<[1], [0], [0], [1], [0, 0, 1, 1], [], []>} : vector<8x32xbf16>, vector<32x32xbf16>, vector<8x32xf32> -> vector<8x32xf32>
    %c0_3 = arith.constant 0 : index
    %c0_4 = arith.constant 0 : index
    %4 = vector.load %arg3[%c0_3, %c0_4] : memref<1x32xf32, #tpu.memory_space<vmem>>, vector<1x32xf32>
    %5 = vector.broadcast %4 : vector<1x32xf32> to vector<8x32xf32>
    %6 = arith.addf %3, %5 : vector<8x32xf32>
    %cst_5 = arith.constant 0.000000e+00 : f32
    %7 = vector.broadcast %cst_5 : f32 to vector<8x32xf32>
    %8 = arith.cmpf ogt, %6, %7 : vector<8x32xf32>
    %cst_6 = arith.constant 0.000000e+00 : f32
    %9 = vector.broadcast %cst_6 : f32 to vector<8x32xf32>
    %10 = arith.minimumf %6, %9 : vector<8x32xf32>
    %11 = math.exp %10 : vector<8x32xf32>
    %cst_7 = arith.constant 1.000000e+00 : f32
    %12 = vector.broadcast %cst_7 : f32 to vector<8x32xf32>
    %13 = arith.subf %11, %12 : vector<8x32xf32>
    %14 = arith.select %8, %6, %13 : vector<8x32xi1>, vector<8x32xf32>
    %15 = arith.truncf %14 : vector<8x32xf32> to vector<8x32xbf16>
    %c0_8 = arith.constant 0 : index
    %c0_9 = arith.constant 0 : index
    %16 = vector.load %arg4[%c0_8, %c0_9] : memref<32x32xbf16, #tpu.memory_space<vmem>>, vector<32x32xbf16>
    %cst_10 = arith.constant dense<0.000000e+00> : vector<8x32xf32>
    %17 = tpu.matmul %15, %16, %cst_10 {dimension_numbers = #tpu.dot_dimension_numbers<[1], [0], [0], [1], [0, 0, 1, 1], [], []>} : vector<8x32xbf16>, vector<32x32xbf16>, vector<8x32xf32> -> vector<8x32xf32>
    %c0_11 = arith.constant 0 : index
    %c0_12 = arith.constant 0 : index
    %18 = vector.load %arg5[%c0_11, %c0_12] : memref<1x32xf32, #tpu.memory_space<vmem>>, vector<1x32xf32>
    %19 = vector.broadcast %18 : vector<1x32xf32> to vector<8x32xf32>
    %20 = arith.addf %17, %19 : vector<8x32xf32>
    %cst_13 = arith.constant 0.000000e+00 : f32
    %21 = vector.broadcast %cst_13 : f32 to vector<8x32xf32>
    %22 = arith.cmpf ogt, %20, %21 : vector<8x32xf32>
    %cst_14 = arith.constant 0.000000e+00 : f32
    %23 = vector.broadcast %cst_14 : f32 to vector<8x32xf32>
    %24 = arith.minimumf %20, %23 : vector<8x32xf32>
    %25 = math.exp %24 : vector<8x32xf32>
    %cst_15 = arith.constant 1.000000e+00 : f32
    %26 = vector.broadcast %cst_15 : f32 to vector<8x32xf32>
    %27 = arith.subf %25, %26 : vector<8x32xf32>
    %28 = arith.select %22, %20, %27 : vector<8x32xi1>, vector<8x32xf32>
    %29 = arith.truncf %28 : vector<8x32xf32> to vector<8x32xbf16>
    %c0_16 = arith.constant 0 : index
    %c0_17 = arith.constant 0 : index
    %30 = vector.load %arg6[%c0_16, %c0_17] : memref<32x256xbf16, #tpu.memory_space<vmem>>, vector<32x256xbf16>
    %cst_18 = arith.constant dense<0.000000e+00> : vector<8x256xf32>
    %31 = tpu.matmul %29, %30, %cst_18 {dimension_numbers = #tpu.dot_dimension_numbers<[1], [0], [0], [1], [0, 0, 1, 1], [], []>} : vector<8x32xbf16>, vector<32x256xbf16>, vector<8x256xf32> -> vector<8x256xf32>
    %c0_19 = arith.constant 0 : index
    %c0_20 = arith.constant 0 : index
    %32 = vector.load %arg7[%c0_19, %c0_20] : memref<1x256xf32, #tpu.memory_space<vmem>>, vector<1x256xf32>
    %33 = vector.broadcast %32 : vector<1x256xf32> to vector<8x256xf32>
    %34 = arith.addf %31, %33 : vector<8x256xf32>
    %35 = arith.truncf %34 : vector<8x256xf32> to vector<8x256xbf16>
    %c0_21 = arith.constant 0 : index
    %c0_22 = arith.constant 0 : index
    %36 = vector.load %arg8[%c0_21, %c0_22] : memref<256x512xbf16, #tpu.memory_space<vmem>>, vector<256x512xbf16>
    %cst_23 = arith.constant dense<0.000000e+00> : vector<8x512xf32>
    %37 = tpu.matmul %35, %36, %cst_23 {dimension_numbers = #tpu.dot_dimension_numbers<[1], [0], [0], [1], [0, 0, 1, 1], [], []>} : vector<8x256xbf16>, vector<256x512xbf16>, vector<8x512xf32> -> vector<8x512xf32>
    %38 = arith.truncf %37 : vector<8x512xf32> to vector<8x512xbf16>
    %c0_24 = arith.constant 0 : index
    %c0_25 = arith.constant 0 : index
    %39 = vector.load %arg9[%c0_24, %c0_25] : memref<512x128xbf16, #tpu.memory_space<vmem>>, vector<512x128xbf16>
    %cst_26 = arith.constant dense<0.000000e+00> : vector<8x128xf32>
    %40 = tpu.matmul %38, %39, %cst_26 {dimension_numbers = #tpu.dot_dimension_numbers<[1], [0], [0], [1], [0, 0, 1, 1], [], []>} : vector<8x512xbf16>, vector<512x128xbf16>, vector<8x128xf32> -> vector<8x128xf32>
    %41 = arith.truncf %40 : vector<8x128xf32> to vector<8x128xbf16>
    %c0_27 = arith.constant 0 : index
    %c0_28 = arith.constant 0 : index
    %42 = vector.load %arg10[%c0_27, %c0_28] : memref<128x512xbf16, #tpu.memory_space<vmem>>, vector<128x512xbf16>
    %cst_29 = arith.constant dense<0.000000e+00> : vector<8x512xf32>
    %43 = tpu.matmul %41, %42, %cst_29 {dimension_numbers = #tpu.dot_dimension_numbers<[1], [0], [0], [1], [0, 0, 1, 1], [], []>} : vector<8x128xbf16>, vector<128x512xbf16>, vector<8x512xf32> -> vector<8x512xf32>
    %44 = arith.subf %37, %43 : vector<8x512xf32>
    %45 = arith.mulf %44, %44 : vector<8x512xf32>
    %46 = arith.truncf %45 : vector<8x512xf32> to vector<8x512xbf16>
    %c0_30 = arith.constant 0 : index
    %c0_31 = arith.constant 0 : index
    %47 = vector.load %arg9[%c0_30, %c0_31] : memref<512x128xbf16, #tpu.memory_space<vmem>>, vector<512x128xbf16>
    %cst_32 = arith.constant dense<0.000000e+00> : vector<8x128xf32>
    %48 = tpu.matmul %46, %47, %cst_32 {dimension_numbers = #tpu.dot_dimension_numbers<[1], [0], [0], [1], [0, 0, 1, 1], [], []>} : vector<8x512xbf16>, vector<512x128xbf16>, vector<8x128xf32> -> vector<8x128xf32>
    %cst_33 = arith.constant 1.000000e-03 : f32
    %49 = vector.broadcast %cst_33 : f32 to vector<8x128xf32>
    %50 = arith.addf %48, %49 : vector<8x128xf32>
    %51 = math.rsqrt %50 : vector<8x128xf32>
    %52 = arith.truncf %51 : vector<8x128xf32> to vector<8x128xbf16>
    %c0_34 = arith.constant 0 : index
    %c0_35 = arith.constant 0 : index
    %53 = vector.load %arg10[%c0_34, %c0_35] : memref<128x512xbf16, #tpu.memory_space<vmem>>, vector<128x512xbf16>
    %cst_36 = arith.constant dense<0.000000e+00> : vector<8x512xf32>
    %54 = tpu.matmul %52, %53, %cst_36 {dimension_numbers = #tpu.dot_dimension_numbers<[1], [0], [0], [1], [0, 0, 1, 1], [], []>} : vector<8x128xbf16>, vector<128x512xbf16>, vector<8x512xf32> -> vector<8x512xf32>
    %55 = arith.mulf %44, %54 : vector<8x512xf32>
    %c0_37 = arith.constant 0 : index
    %c0_38 = arith.constant 0 : index
    %56 = vector.load %arg11[%c0_37, %c0_38] : memref<1x512xf32, #tpu.memory_space<vmem>>, vector<1x512xf32>
    %57 = vector.broadcast %56 : vector<1x512xf32> to vector<8x512xf32>
    %58 = arith.mulf %55, %57 : vector<8x512xf32>
    %c0_39 = arith.constant 0 : index
    %c0_40 = arith.constant 0 : index
    %59 = vector.load %arg12[%c0_39, %c0_40] : memref<1x512xf32, #tpu.memory_space<vmem>>, vector<1x512xf32>
    %60 = vector.broadcast %59 : vector<1x512xf32> to vector<8x512xf32>
    %61 = arith.addf %58, %60 : vector<8x512xf32>
    %cst_41 = arith.constant 0.000000e+00 : f32
    %62 = vector.broadcast %cst_41 : f32 to vector<8x512xf32>
    %63 = arith.cmpf ogt, %61, %62 : vector<8x512xf32>
    %cst_42 = arith.constant 0.000000e+00 : f32
    %64 = vector.broadcast %cst_42 : f32 to vector<8x512xf32>
    %65 = arith.minimumf %61, %64 : vector<8x512xf32>
    %66 = math.exp %65 : vector<8x512xf32>
    %cst_43 = arith.constant 1.000000e+00 : f32
    %67 = vector.broadcast %cst_43 : f32 to vector<8x512xf32>
    %68 = arith.subf %66, %67 : vector<8x512xf32>
    %69 = arith.select %63, %61, %68 : vector<8x512xi1>, vector<8x512xf32>
    %70 = arith.truncf %69 : vector<8x512xf32> to vector<8x512xbf16>
    %c0_44 = arith.constant 0 : index
    %c0_45 = arith.constant 0 : index
    %71 = vector.load %arg13[%c0_44, %c0_45] : memref<512x256xbf16, #tpu.memory_space<vmem>>, vector<512x256xbf16>
    %cst_46 = arith.constant dense<0.000000e+00> : vector<8x256xf32>
    %72 = tpu.matmul %70, %71, %cst_46 {dimension_numbers = #tpu.dot_dimension_numbers<[1], [0], [0], [1], [0, 0, 1, 1], [], []>} : vector<8x512xbf16>, vector<512x256xbf16>, vector<8x256xf32> -> vector<8x256xf32>
    %c0_47 = arith.constant 0 : index
    %c0_48 = arith.constant 0 : index
    %73 = vector.load %arg14[%c0_47, %c0_48] : memref<1x256xf32, #tpu.memory_space<vmem>>, vector<1x256xf32>
    %74 = vector.broadcast %73 : vector<1x256xf32> to vector<8x256xf32>
    %75 = arith.addf %72, %74 : vector<8x256xf32>
    %c0_49 = arith.constant 0 : index
    %c0_50 = arith.constant 0 : index
    %76 = vector.load %arg15[%c0_49, %c0_50] : memref<8x256xf32, #tpu.memory_space<vmem>>, vector<8x256xf32>
    tpu.vector_store %arg15[%c0_49, %c0_50], %75 {strides = array<i32>} : memref<8x256xf32, #tpu.memory_space<vmem>>, vector<8x256xf32>,
    return
  }
  func.func @transform_0(%arg0: i32) -> (i32, i32) {
    %c0_i32 = arith.constant 0 : i32
    %c0_i32_0 = arith.constant 0 : i32
    return %arg0, %c0_i32 : i32, i32
  }
  func.func @transform_1(%arg0: i32) -> (i32, i32) {
    %c0_i32 = arith.constant 0 : i32
    %c0_i32_0 = arith.constant 0 : i32
    %c0_i32_1 = arith.constant 0 : i32
    return %c0_i32, %c0_i32_0 : i32, i32
  }
  func.func @transform_2(%arg0: i32) -> (i32, i32) {
    %c0_i32 = arith.constant 0 : i32
    %c0_i32_0 = arith.constant 0 : i32
    %c0_i32_1 = arith.constant 0 : i32
    return %c0_i32, %c0_i32_0 : i32, i32
  }
  func.func @transform_3(%arg0: i32) -> (i32, i32) {
    %c0_i32 = arith.constant 0 : i32
    %c0_i32_0 = arith.constant 0 : i32
    %c0_i32_1 = arith.constant 0 : i32
    return %c0_i32, %c0_i32_0 : i32, i32
  }
  func.func @transform_4(%arg0: i32) -> (i32, i32) {
    %c0_i32 = arith.constant 0 : i32
    %c0_i32_0 = arith.constant 0 : i32
    %c0_i32_1 = arith.constant 0 : i32
    return %c0_i32, %c0_i32_0 : i32, i32
  }
  func.func @transform_5(%arg0: i32) -> (i32, i32) {
    %c0_i32 = arith.constant 0 : i32
    %c0_i32_0 = arith.constant 0 : i32
    %c0_i32_1 = arith.constant 0 : i32
    return %c0_i32, %c0_i32_0 : i32, i32
  }
  func.func @transform_6(%arg0: i32) -> (i32, i32) {
    %c0_i32 = arith.constant 0 : i32
    %c0_i32_0 = arith.constant 0 : i32
    %c0_i32_1 = arith.constant 0 : i32
    return %c0_i32, %c0_i32_0 : i32, i32
  }
  func.func @transform_7(%arg0: i32) -> (i32, i32) {
    %c0_i32 = arith.constant 0 : i32
    %c0_i32_0 = arith.constant 0 : i32
    %c0_i32_1 = arith.constant 0 : i32
    return %c0_i32, %c0_i32_0 : i32, i32
  }
  func.func @transform_8(%arg0: i32) -> (i32, i32) {
    %c0_i32 = arith.constant 0 : i32
    %c0_i32_0 = arith.constant 0 : i32
    %c0_i32_1 = arith.constant 0 : i32
    return %c0_i32, %c0_i32_0 : i32, i32
  }
  func.func @transform_9(%arg0: i32) -> (i32, i32) {
    %c0_i32 = arith.constant 0 : i32
    %c0_i32_0 = arith.constant 0 : i32
    %c0_i32_1 = arith.constant 0 : i32
    return %c0_i32, %c0_i32_0 : i32, i32
  }
  func.func @transform_10(%arg0: i32) -> (i32, i32) {
    %c0_i32 = arith.constant 0 : i32
    %c0_i32_0 = arith.constant 0 : i32
    %c0_i32_1 = arith.constant 0 : i32
    return %c0_i32, %c0_i32_0 : i32, i32
  }
  func.func @transform_11(%arg0: i32) -> (i32, i32) {
    %c0_i32 = arith.constant 0 : i32
    %c0_i32_0 = arith.constant 0 : i32
    %c0_i32_1 = arith.constant 0 : i32
    return %c0_i32, %c0_i32_0 : i32, i32
  }
  func.func @transform_12(%arg0: i32) -> (i32, i32) {
    %c0_i32 = arith.constant 0 : i32
    %c0_i32_0 = arith.constant 0 : i32
    %c0_i32_1 = arith.constant 0 : i32
    return %c0_i32, %c0_i32_0 : i32, i32
  }
  func.func @transform_13(%arg0: i32) -> (i32, i32) {
    %c0_i32 = arith.constant 0 : i32
    %c0_i32_0 = arith.constant 0 : i32
    %c0_i32_1 = arith.constant 0 : i32
    return %c0_i32, %c0_i32_0 : i32, i32
  }
  func.func @transform_14(%arg0: i32) -> (i32, i32) {
    %c0_i32 = arith.constant 0 : i32
    %c0_i32_0 = arith.constant 0 : i32
    return %arg0, %c0_i32 : i32, i32
  }
}

</mosaic_0001>

<llo_original>
// kernel: _forward.1
$region0: #{_forward.1}
  #allocation0 [shape = 'u32[]', space=smem, size = 0x4, offset = 0x4, fixed_abs, tag = 'smem constant byte address 0x4 - core index']
  #allocation1 [shape = 'u32[144,128]{1,0:T(1,128)}', space=vmem, size = 0x12000, scoped, tag = 'internal scratch']
  %s0 = inlined_call_operand.hbm [shape: f32[8,32], index: 0, kind: input, shape index: {}]
  %s1 = inlined_call_operand.hbm [shape: bf16[32,32], index: 1, kind: input, shape index: {}]
  %s2 = inlined_call_operand.hbm [shape: f32[1,32], index: 2, kind: input, shape index: {}]
  %s3 = inlined_call_operand.hbm [shape: bf16[32,32], index: 3, kind: input, shape index: {}]
  %s4 = inlined_call_operand.hbm [shape: f32[1,32], index: 4, kind: input, shape index: {}]
  %s5 = inlined_call_operand.hbm [shape: bf16[32,256], index: 5, kind: input, shape index: {}]
  %s6 = inlined_call_operand.hbm [shape: f32[1,256], index: 6, kind: input, shape index: {}]
  %s7 = inlined_call_operand.hbm [shape: bf16[256,512], index: 7, kind: input, shape index: {}]
  %s8 = inlined_call_operand.hbm [shape: bf16[512,128], index: 8, kind: input, shape index: {}]
  %s9 = inlined_call_operand.hbm [shape: bf16[128,512], index: 9, kind: input, shape index: {}]
  %s10 = inlined_call_operand.hbm [shape: f32[1,512], index: 10, kind: input, shape index: {}]
  %s11 = inlined_call_operand.hbm [shape: f32[1,512], index: 11, kind: input, shape index: {}]
  %s12 = inlined_call_operand.hbm [shape: bf16[512,256], index: 12, kind: input, shape index: {}]
  %s13 = inlined_call_operand.hbm [shape: f32[1,256], index: 13, kind: input, shape index: {}]
  %s14 = inlined_call_operand.hbm [shape: f32[8,256], index: 14, kind: output, shape index: {}]
  %s15 = sld [smem:[#allocation0]]
  $region122: #{_forward.1} parent=0
    _
  %s17 = ssub.s32 1, %s15
  %s18 = scalar_select 0, %s17, %s15
  $region1: #{_forward.1} parent=0
    #allocation2 [shape = 'u8[4096]{0}', space=vmem, size = 0x1000, scoped, tag = 'input window, operand 0, single buffered']
    #allocation3 [shape = 's32[1]{0}', space=sflag, size = 0x4, scoped, tag = 'scoped memory for _forward.1']
    #allocation4 [shape = 's32[1]{0}', space=sflag, size = 0x4, scoped, tag = 'scoped memory for _forward.1']
    #allocation5 [shape = 'u8[8192]{0}', space=vmem, size = 0x2000, scoped, tag = 'input window, operand 1, single buffered']
    #allocation6 [shape = 's32[1]{0}', space=sflag, size = 0x4, scoped, tag = 'scoped memory for _forward.1']
    #allocation7 [shape = 'u8[512]{0}', space=vmem, size = 0x400, scoped, tag = 'input window, operand 2, single buffered']
    #allocation8 [shape = 'u8[8192]{0}', space=vmem, size = 0x2000, scoped, tag = 'input window, operand 3, single buffered']
    #allocation9 [shape = 's32[1]{0}', space=sflag, size = 0x4, scoped, tag = 'scoped memory for _forward.1']
    #allocation10 [shape = 'u8[512]{0}', space=vmem, size = 0x400, scoped, tag = 'input window, operand 4, single buffered']
    #allocation11 [shape = 'u8[16384]{0}', space=vmem, size = 0x4000, scoped, tag = 'input window, operand 5, single buffered']
    #allocation12 [shape = 's32[1]{0}', space=sflag, size = 0x4, scoped, tag = 'scoped memory for _forward.1']
    #allocation13 [shape = 'u8[1024]{0}', space=vmem, size = 0x400, scoped, tag = 'input window, operand 6, single buffered']
    #allocation14 [shape = 'u8[262144]{0}', space=vmem, size = 0x40000, scoped, tag = 'input window, operand 7, single buffered']
    #allocation15 [shape = 's32[1]{0}', space=sflag, size = 0x4, scoped, tag = 'scoped memory for _forward.1']
    #allocation16 [shape = 'u8[131072]{0}', space=vmem, size = 0x20000, scoped, tag = 'input window, operand 8, single buffered']
    #allocation17 [shape = 'u8[131072]{0}', space=vmem, size = 0x20000, scoped, tag = 'input window, operand 9, single buffered']
    #allocation18 [shape = 's32[1]{0}', space=sflag, size = 0x4, scoped, tag = 'scoped memory for _forward.1']
    #allocation19 [shape = 'u8[2048]{0}', space=vmem, size = 0x800, scoped, tag = 'input window, operand 10, single buffered']
    #allocation20 [shape = 'u8[2048]{0}', space=vmem, size = 0x800, scoped, tag = 'input window, operand 11, single buffered']
    #allocation21 [shape = 's32[1]{0}', space=sflag, size = 0x4, scoped, tag = 'scoped memory for _forward.1']
    #allocation22 [shape = 'u8[262144]{0}', space=vmem, size = 0x40000, scoped, tag = 'input window, operand 12, single buffered']
    #allocation23 [shape = 'u8[1024]{0}', space=vmem, size = 0x400, scoped, tag = 'input window, operand 13, single buffered']
    #allocation24 [shape = 's32[1]{0}', space=sflag, size = 0x4, scoped, tag = 'scoped memory for _forward.1']
    #allocation25 [shape = 'u8[8192]{0}', space=vmem, size = 0x2000, scoped, tag = 'output window, operand 0, single buffered']
    %19 = vsyncpa [#allocation3], 0
    %20 = vsyncpa [#allocation6], 0
    %21 = vsyncpa [#allocation9], 0
    %22 = vsyncpa [#allocation12], 0
    %23 = vsyncpa [#allocation15], 0
    %24 = vsyncpa [#allocation18], 0
    %25 = vsyncpa [#allocation21], 0
    %26 = vsyncpa [#allocation24], 0
    %27 = vsyncpa [#allocation4], 0
    // Predicated region
    $region2: #{_forward.1} parent=1 // pred_check
      _
    $region3: #{_forward.1} parent=1 // pred_check_branch
      %29 = sbr.rel (0) target = $region5
    $region4: #{_forward.1} parent=1 // pred_region
      %s31 = ssub.s32 128, 128
      %32 = vsyncadd [#allocation3], %s31
      %s34 = sshll.u32 [#allocation2], 4
      %s35 = int_to_ptr.vmem [resolvable:$true] %s34
      %37 = dma.hbm_to_vmem [thread:$0]  %s0, 128, %s35, [#allocation3]
    $region5: #{_forward.1} parent=1 // pred_fallthru
      _
    // Predicated region
    $region6: #{_forward.1} parent=1 // pred_check
      _
    $region7: #{_forward.1} parent=1 // pred_check_branch
      %39 = sbr.rel (0) target = $region9
    $region8: #{_forward.1} parent=1 // pred_region
      %s41 = ssub.s32 256, 256
      %42 = vsyncadd [#allocation6], %s41
      %s43 = sshll.u32 [#allocation5], 4
      %s44 = int_to_ptr.vmem [resolvable:$true] %s43
      %49 = dma.hbm_to_vmem [thread:$0]  %s1, 256, %s44, [#allocation6], 64, 64, 4
    $region9: #{_forward.1} parent=1 // pred_fallthru
      _
    // Predicated region
    $region10: #{_forward.1} parent=1 // pred_check
      _
    $region11: #{_forward.1} parent=1 // pred_check_branch
      %51 = sbr.rel (0) target = $region13
    $region12: #{_forward.1} parent=1 // pred_region
      %s53 = ssub.s32 16, 16
      %54 = vsyncadd [#allocation6], %s53
      %s56 = sshll.u32 [#allocation7], 4
      %s57 = int_to_ptr.vmem [resolvable:$true] %s56
      %59 = dma.hbm_to_vmem [thread:$0]  %s2, 16, %s57, [#allocation6]
    $region13: #{_forward.1} parent=1 // pred_fallthru
      _
    // Predicated region
    $region14: #{_forward.1} parent=1 // pred_check
      _
    $region15: #{_forward.1} parent=1 // pred_check_branch
      %61 = sbr.rel (0) target = $region17
    $region16: #{_forward.1} parent=1 // pred_region
      %s63 = ssub.s32 256, 256
      %64 = vsyncadd [#allocation9], %s63
      %s65 = sshll.u32 [#allocation8], 4
      %s66 = int_to_ptr.vmem [resolvable:$true] %s65
      %71 = dma.hbm_to_vmem [thread:$0]  %s3, 256, %s66, [#allocation9], 64, 64, 4
    $region17: #{_forward.1} parent=1 // pred_fallthru
      _
    // Predicated region
    $region18: #{_forward.1} parent=1 // pred_check
      _
    $region19: #{_forward.1} parent=1 // pred_check_branch
      %73 = sbr.rel (0) target = $region21
    $region20: #{_forward.1} parent=1 // pred_region
      %s75 = ssub.s32 16, 16
      %76 = vsyncadd [#allocation9], %s75
      %s78 = sshll.u32 [#allocation10], 4
      %s79 = int_to_ptr.vmem [resolvable:$true] %s78
      %81 = dma.hbm_to_vmem [thread:$0]  %s4, 16, %s79, [#allocation9]
    $region21: #{_forward.1} parent=1 // pred_fallthru
      _
    // Predicated region
    $region22: #{_forward.1} parent=1 // pred_check
      _
    $region23: #{_forward.1} parent=1 // pred_check_branch
      %83 = sbr.rel (0) target = $region25
    $region24: #{_forward.1} parent=1 // pred_region
      %s85 = ssub.s32 512, 512
      %86 = vsyncadd [#allocation12], %s85
      %s87 = sshll.u32 [#allocation11], 4
      %s88 = int_to_ptr.vmem [resolvable:$true] %s87
      %93 = dma.hbm_to_vmem [thread:$0]  %s5, 512, %s88, [#allocation12], 128, 128, 8
    $region25: #{_forward.1} parent=1 // pred_fallthru
      _
    // Predicated region
    $region26: #{_forward.1} parent=1 // pred_check
      _
    $region27: #{_forward.1} parent=1 // pred_check_branch
      %95 = sbr.rel (0) target = $region29
    $region28: #{_forward.1} parent=1 // pred_region
      %s97 = ssub.s32 32, 32
      %98 = vsyncadd [#allocation12], %s97
      %s100 = sshll.u32 [#allocation13], 4
      %s101 = int_to_ptr.vmem [resolvable:$true] %s100
      %103 = dma.hbm_to_vmem [thread:$0]  %s6, 32, %s101, [#allocation12]
    $region29: #{_forward.1} parent=1 // pred_fallthru
      _
    // Predicated region
    $region30: #{_forward.1} parent=1 // pred_check
      _
    $region31: #{_forward.1} parent=1 // pred_check_branch
      %105 = sbr.rel (0) target = $region33
    $region32: #{_forward.1} parent=1 // pred_region
      %s107 = ssub.s32 8192, 8192
      %108 = vsyncadd [#allocation15], %s107
      %s109 = sshll.u32 [#allocation14], 4
      %s110 = int_to_ptr.vmem [resolvable:$true] %s109
      %115 = dma.hbm_to_vmem [thread:$0]  %s7, 8192, %s110, [#allocation15], 256, 256, 16
    $region33: #{_forward.1} parent=1 // pred_fallthru
      _
    // Predicated region
    $region34: #{_forward.1} parent=1 // pred_check
      _
    $region35: #{_forward.1} parent=1 // pred_check_branch
      %117 = sbr.rel (0) target = $region37
    $region36: #{_forward.1} parent=1 // pred_region
      %s119 = ssub.s32 4096, 4096
      %120 = vsyncadd [#allocation15], %s119
      %s121 = sshll.u32 [#allocation16], 4
      %s122 = int_to_ptr.vmem [resolvable:$true] %s121
      %127 = dma.hbm_to_vmem [thread:$0]  %s8, 4096, %s122, [#allocation15], 64, 64, 4
    $region37: #{_forward.1} parent=1 // pred_fallthru
      _
    // Predicated region
    $region38: #{_forward.1} parent=1 // pred_check
      _
    $region39: #{_forward.1} parent=1 // pred_check_branch
      %129 = sbr.rel (0) target = $region41
    $region40: #{_forward.1} parent=1 // pred_region
      %s131 = ssub.s32 4096, 4096
      %132 = vsyncadd [#allocation18], %s131
      %s133 = sshll.u32 [#allocation17], 4
      %s134 = int_to_ptr.vmem [resolvable:$true] %s133
      %139 = dma.hbm_to_vmem [thread:$0]  %s9, 4096, %s134, [#allocation18], 256, 256, 16
    $region41: #{_forward.1} parent=1 // pred_fallthru
      _
    // Predicated region
    $region42: #{_forward.1} parent=1 // pred_check
      _
    $region43: #{_forward.1} parent=1 // pred_check_branch
      %141 = sbr.rel (0) target = $region45
    $region44: #{_forward.1} parent=1 // pred_region
      %s143 = ssub.s32 64, 64
      %144 = vsyncadd [#allocation18], %s143
      %s146 = sshll.u32 [#allocation19], 4
      %s147 = int_to_ptr.vmem [resolvable:$true] %s146
      %149 = dma.hbm_to_vmem [thread:$0]  %s10, 64, %s147, [#allocation18]
    $region45: #{_forward.1} parent=1 // pred_fallthru
      _
    // Predicated region
    $region46: #{_forward.1} parent=1 // pred_check
      _
    $region47: #{_forward.1} parent=1 // pred_check_branch
      %151 = sbr.rel (0) target = $region49
    $region48: #{_forward.1} parent=1 // pred_region
      %s153 = ssub.s32 64, 64
      %154 = vsyncadd [#allocation21], %s153
      %s156 = sshll.u32 [#allocation20], 4
      %s157 = int_to_ptr.vmem [resolvable:$true] %s156
      %159 = dma.hbm_to_vmem [thread:$0]  %s11, 64, %s157, [#allocation21]
    $region49: #{_forward.1} parent=1 // pred_fallthru
      _
    // Predicated region
    $region50: #{_forward.1} parent=1 // pred_check
      _
    $region51: #{_forward.1} parent=1 // pred_check_branch
      %161 = sbr.rel (0) target = $region53
    $region52: #{_forward.1} parent=1 // pred_region
      %s163 = ssub.s32 8192, 8192
      %164 = vsyncadd [#allocation21], %s163
      %s165 = sshll.u32 [#allocation22], 4
      %s166 = int_to_ptr.vmem [resolvable:$true] %s165
      %171 = dma.hbm_to_vmem [thread:$0]  %s12, 8192, %s166, [#allocation21], 128, 128, 8
    $region53: #{_forward.1} parent=1 // pred_fallthru
      _
    // Predicated region
    $region54: #{_forward.1} parent=1 // pred_check
      _
    $region55: #{_forward.1} parent=1 // pred_check_branch
      %173 = sbr.rel (0) target = $region57
    $region56: #{_forward.1} parent=1 // pred_region
      %s175 = ssub.s32 32, 32
      %176 = vsyncadd [#allocation24], %s175
      %s178 = sshll.u32 [#allocation23], 4
      %s179 = int_to_ptr.vmem [resolvable:$true] %s178
      %181 = dma.hbm_to_vmem [thread:$0]  %s13, 32, %s179, [#allocation24]
    $region57: #{_forward.1} parent=1 // pred_fallthru
      _
    // Predicated region
    $region58: #{_forward.1} parent=1 // pred_check
      _
    $region59: #{_forward.1} parent=1 // pred_check_branch
      %183 = sbr.rel (0) target = $region61
    $region60: #{_forward.1} parent=1 // pred_region
      %184 = dma.done [#allocation3], 128
    $region61: #{_forward.1} parent=1 // pred_fallthru
      _
    // Predicated region
    $region62: #{_forward.1} parent=1 // pred_check
      _
    $region63: #{_forward.1} parent=1 // pred_check_branch
      %186 = sbr.rel (0) target = $region65
    $region64: #{_forward.1} parent=1 // pred_region
      %187 = dma.done [#allocation6], 256
    $region65: #{_forward.1} parent=1 // pred_fallthru
      _
    // Predicated region
    $region66: #{_forward.1} parent=1 // pred_check
      _
    $region67: #{_forward.1} parent=1 // pred_check_branch
      %189 = sbr.rel (0) target = $region69
    $region68: #{_forward.1} parent=1 // pred_region
      %190 = dma.done [#allocation6], 16
    $region69: #{_forward.1} parent=1 // pred_fallthru
      _
    // Predicated region
    $region70: #{_forward.1} parent=1 // pred_check
      _
    $region71: #{_forward.1} parent=1 // pred_check_branch
      %192 = sbr.rel (0) target = $region73
    $region72: #{_forward.1} parent=1 // pred_region
      %193 = dma.done [#allocation9], 256
    $region73: #{_forward.1} parent=1 // pred_fallthru
      _
    // Predicated region
    $region74: #{_forward.1} parent=1 // pred_check
      _
    $region75: #{_forward.1} parent=1 // pred_check_branch
      %195 = sbr.rel (0) target = $region77
    $region76: #{_forward.1} parent=1 // pred_region
      %196 = dma.done [#allocation9], 16
    $region77: #{_forward.1} parent=1 // pred_fallthru
      _
    // Predicated region
    $region78: #{_forward.1} parent=1 // pred_check
      _
    $region79: #{_forward.1} parent=1 // pred_check_branch
      %198 = sbr.rel (0) target = $region81
    $region80: #{_forward.1} parent=1 // pred_region
      %199 = dma.done [#allocation12], 512
    $region81: #{_forward.1} parent=1 // pred_fallthru
      _
    // Predicated region
    $region82: #{_forward.1} parent=1 // pred_check
      _
    $region83: #{_forward.1} parent=1 // pred_check_branch
      %201 = sbr.rel (0) target = $region85
    $region84: #{_forward.1} parent=1 // pred_region
      %202 = dma.done [#allocation12], 32
    $region85: #{_forward.1} parent=1 // pred_fallthru
      _
    // Predicated region
    $region86: #{_forward.1} parent=1 // pred_check
      _
    $region87: #{_forward.1} parent=1 // pred_check_branch
      %204 = sbr.rel (0) target = $region89
    $region88: #{_forward.1} parent=1 // pred_region
      %205 = dma.done [#allocation15], 8192
    $region89: #{_forward.1} parent=1 // pred_fallthru
      _
    // Predicated region
    $region90: #{_forward.1} parent=1 // pred_check
      _
    $region91: #{_forward.1} parent=1 // pred_check_branch
      %207 = sbr.rel (0) target = $region93
    $region92: #{_forward.1} parent=1 // pred_region
      %208 = dma.done [#allocation15], 4096
    $region93: #{_forward.1} parent=1 // pred_fallthru
      _
    // Predicated region
    $region94: #{_forward.1} parent=1 // pred_check
      _
    $region95: #{_forward.1} parent=1 // pred_check_branch
      %210 = sbr.rel (0) target = $region97
    $region96: #{_forward.1} parent=1 // pred_region
      %211 = dma.done [#allocation18], 4096
    $region97: #{_forward.1} parent=1 // pred_fallthru
      _
    // Predicated region
    $region98: #{_forward.1} parent=1 // pred_check
      _
    $region99: #{_forward.1} parent=1 // pred_check_branch
      %213 = sbr.rel (0) target = $region101
    $region100: #{_forward.1} parent=1 // pred_region
      %214 = dma.done [#allocation18], 64
    $region101: #{_forward.1} parent=1 // pred_fallthru
      _
    // Predicated region
    $region102: #{_forward.1} parent=1 // pred_check
      _
    $region103: #{_forward.1} parent=1 // pred_check_branch
      %216 = sbr.rel (0) target = $region105
    $region104: #{_forward.1} parent=1 // pred_region
      %217 = dma.done [#allocation21], 64
    $region105: #{_forward.1} parent=1 // pred_fallthru
      _
    // Predicated region
    $region106: #{_forward.1} parent=1 // pred_check
      _
    $region107: #{_forward.1} parent=1 // pred_check_branch
      %219 = sbr.rel (0) target = $region109
    $region108: #{_forward.1} parent=1 // pred_region
      %220 = dma.done [#allocation21], 8192
    $region109: #{_forward.1} parent=1 // pred_fallthru
      _
    // Predicated region
    $region110: #{_forward.1} parent=1 // pred_check
      _
    $region111: #{_forward.1} parent=1 // pred_check_branch
      %222 = sbr.rel (0) target = $region113
    $region112: #{_forward.1} parent=1 // pred_region
      %223 = dma.done [#allocation24], 32
    $region113: #{_forward.1} parent=1 // pred_fallthru
      _
    %v225 = vld [vmem:[#allocation2] sm:$0xff]
    %v226 = vpack.c.bf16 %v225, %v225
    %v227 = vld [vmem:[#allocation5] sm:$0xf]
    %v228 = vld [vmem:[#allocation5 + $0x4] sm:$0xf]
    %v229 = vld [vmem:[#allocation5 + $0x8] sm:$0xf]
    %v230 = vld [vmem:[#allocation5 + $0xc] sm:$0xf]
    %v231 = vld [vmem:[#allocation7] sm:$0x1]
    %v233 = vlaneseq
    %v234 = vshrl.u32 %v233, 7
    %v235 = vsub.s32 0, %v234
    %v236 = vrot.slane %v231, %v235
    %v242 = vunpack.c.l.b16 %v227
    %v243 = vunpack.c.l.b16 %v228
    %v244 = vunpack.c.l.b16 %v229
    %v245 = vunpack.c.l.b16 %v230
    %v246 = vpack.c.b16 %v243, %v242
    %v247 = vpack.c.b16 %v245, %v244
    %vm250 = vcmask 261120
    %v252 = vsel %vm250, %v226, 0
    %254 = vmatprep.subr.bf16.mxu0 0
    %255 = vmatpush1.bf16.msra.mxu0 %v246
    %256 = vmatprep.subr.bf16.mxu0 0
    %257 = vmatpush1.bf16.msra.mxu0 %v247
    %258 = vmatprep.subr.bf16.mxu0 0
    %259 = vmatpush1.bf16.msra.mxu0 0
    %260 = vmatprep.subr.bf16.mxu0 0
    %261 = vmatpush1.bf16.msra.mxu0 0
    %262 = vmatprep.subr.bf16.mxu0 0
    %263 = vmatpush1.bf16.msra.mxu0 0
    %264 = vmatprep.subr.bf16.mxu0 0
    %265 = vmatpush1.bf16.msra.mxu0 0
    %266 = vmatprep.subr.bf16.mxu0 0
    %267 = vmatpush1.bf16.msra.mxu0 0
    %268 = vmatprep.subr.bf16.mxu0 0
    %269 = vmatpush1.bf16.msra.mxu0 0
    %270 = vmatprep.subr.bf16.mxu0 0
    %271 = vmatpush1.bf16.msra.mxu0 0
    %272 = vmatprep.subr.bf16.mxu0 0
    %273 = vmatpush1.bf16.msra.mxu0 0
    %274 = vmatprep.subr.bf16.mxu0 0
    %275 = vmatpush1.bf16.msra.mxu0 0
    %276 = vmatprep.subr.bf16.mxu0 0
    %277 = vmatpush1.bf16.msra.mxu0 0
    %278 = vmatprep.subr.bf16.mxu0 0
    %279 = vmatpush1.bf16.msra.mxu0 0
    %280 = vmatprep.subr.bf16.mxu0 0
    %281 = vmatpush1.bf16.msra.mxu0 0
    %282 = vmatprep.subr.bf16.mxu0 0
    %283 = vmatpush1.bf16.msra.mxu0 0
    %284 = vmatprep.subr.bf16.mxu0 0
    %285 = vmatpush1.bf16.msra.mxu0 0
    %286 = vmatprep.mubr.bf16.mxu0 0
    %287 = vmatmul.mubr.bf16.gmra.mrb[0].mxu0 %v252
    %v288 = vpop.f32.mrb[0].mxu0
    %v289 = vadd.f32 %v236, %v288
    %v290 = vpop.f32.mrb[0].mxu0
    %v291 = vpop.f32.mrb[0].mxu0
    %v292 = vpop.f32.mrb[0].mxu0
    %293 = vdwg.mxu0
    %vm294 = vcmp.gt.f32.partialorder %v289, 0.0
    %v295 = vmin.f32 %v289, 0.0
    %v296 = vmul.f32 %v295, 1.442695
    %v297 = vpow.pop %v296
    %v298 = vsub.f32 %v297, 1.0
    %v299 = vsel %vm294, %v289, %v298
    %v300 = vpack.c.bf16 %v299, %v299
    %v301 = vld [vmem:[#allocation8] sm:$0xf]
    %v302 = vld [vmem:[#allocation8 + $0x4] sm:$0xf]
    %v303 = vld [vmem:[#allocation8 + $0x8] sm:$0xf]
    %v304 = vld [vmem:[#allocation8 + $0xc] sm:$0xf]
    %v305 = vld [vmem:[#allocation10] sm:$0x1]
    %v307 = vlaneseq
    %v308 = vshrl.u32 %v307, 7
    %v309 = vsub.s32 0, %v308
    %v310 = vrot.slane %v305, %v309
    %v316 = vunpack.c.l.b16 %v301
    %v317 = vunpack.c.l.b16 %v302
    %v318 = vunpack.c.l.b16 %v303
    %v319 = vunpack.c.l.b16 %v304
    %v320 = vpack.c.b16 %v317, %v316
    %v321 = vpack.c.b16 %v319, %v318
    %v325 = vsel %vm250, %v300, 0
    %327 = vmatprep.subr.bf16.mxu0 0
    %328 = vmatpush1.bf16.msra.mxu0 %v320
    %329 = vmatprep.subr.bf16.mxu0 0
    %330 = vmatpush1.bf16.msra.mxu0 %v321
    %331 = vmatprep.subr.bf16.mxu0 0
    %332 = vmatpush1.bf16.msra.mxu0 0
    %333 = vmatprep.subr.bf16.mxu0 0
    %334 = vmatpush1.bf16.msra.mxu0 0
    %335 = vmatprep.subr.bf16.mxu0 0
    %336 = vmatpush1.bf16.msra.mxu0 0
    %337 = vmatprep.subr.bf16.mxu0 0
    %338 = vmatpush1.bf16.msra.mxu0 0
    %339 = vmatprep.subr.bf16.mxu0 0
    %340 = vmatpush1.bf16.msra.mxu0 0
    %341 = vmatprep.subr.bf16.mxu0 0
    %342 = vmatpush1.bf16.msra.mxu0 0
    %343 = vmatprep.subr.bf16.mxu0 0
    %344 = vmatpush1.bf16.msra.mxu0 0
    %345 = vmatprep.subr.bf16.mxu0 0
    %346 = vmatpush1.bf16.msra.mxu0 0
    %347 = vmatprep.subr.bf16.mxu0 0
    %348 = vmatpush1.bf16.msra.mxu0 0
    %349 = vmatprep.subr.bf16.mxu0 0
    %350 = vmatpush1.bf16.msra.mxu0 0
    %351 = vmatprep.subr.bf16.mxu0 0
    %352 = vmatpush1.bf16.msra.mxu0 0
    %353 = vmatprep.subr.bf16.mxu0 0
    %354 = vmatpush1.bf16.msra.mxu0 0
    %355 = vmatprep.subr.bf16.mxu0 0
    %356 = vmatpush1.bf16.msra.mxu0 0
    %357 = vmatprep.subr.bf16.mxu0 0
    %358 = vmatpush1.bf16.msra.mxu0 0
    %359 = vmatprep.mubr.bf16.mxu0 0
    %360 = vmatmul.mubr.bf16.gmra.mrb[0].mxu0 %v325
    %v361 = vpop.f32.mrb[0].mxu0
    %v362 = vadd.f32 %v310, %v361
    %v363 = vpop.f32.mrb[0].mxu0
    %v364 = vpop.f32.mrb[0].mxu0
    %v365 = vpop.f32.mrb[0].mxu0
    %366 = vdwg.mxu0
    %vm367 = vcmp.gt.f32.partialorder %v362, 0.0
    %v368 = vmin.f32 %v362, 0.0
    %v369 = vmul.f32 %v368, 1.442695
    %v370 = vpow.pop %v369
    %v371 = vsub.f32 %v370, 1.0
    %v372 = vsel %vm367, %v362, %v371
    %v373 = vpack.c.bf16 %v372, %v372
    %v374 = vld [vmem:[#allocation11] sm:$0xff]
    %v375 = vld [vmem:[#allocation11 + $0x8] sm:$0xff]
    %v376 = vld [vmem:[#allocation11 + $0x10] sm:$0xff]
    %v377 = vld [vmem:[#allocation11 + $0x18] sm:$0xff]
    %v378 = vld [vmem:[#allocation13] sm:$0x3]
    %v380 = vlaneseq
    %v381 = vshrl.u32 %v380, 7
    %v382 = vsub.s32 0, %v381
    %v383 = vrot.slane %v378, %v382
    %v384 = vlaneseq
    %v385 = vshrl.u32 %v384, 7
    %v386 = vsub.s32 1, %v385
    %v387 = vrot.slane %v378, %v386
    %v394 = vunpack.c.l.b16 %v374
    %v395 = vunpack.c.h.b16 %v374
    %v396 = vunpack.c.l.b16 %v375
    %v397 = vunpack.c.h.b16 %v375
    %v398 = vunpack.c.l.b16 %v376
    %v399 = vunpack.c.h.b16 %v376
    %v400 = vunpack.c.l.b16 %v377
    %v401 = vunpack.c.h.b16 %v377
    %v402 = vpack.c.b16 %v396, %v394
    %v403 = vpack.c.b16 %v397, %v395
    %v404 = vpack.c.b16 %v400, %v398
    %v405 = vpack.c.b16 %v401, %v399
    %v411 = vsel %vm250, %v373, 0
    %413 = vmatprep.subr.bf16.mxu0 %v403
    %414 = vmatpush1.bf16.msra.mxu0 %v402
    %415 = vmatprep.subr.bf16.mxu0 %v405
    %416 = vmatpush1.bf16.msra.mxu0 %v404
    %417 = vmatprep.subr.bf16.mxu0 0
    %418 = vmatpush1.bf16.msra.mxu0 0
    %419 = vmatprep.subr.bf16.mxu0 0
    %420 = vmatpush1.bf16.msra.mxu0 0
    %421 = vmatprep.subr.bf16.mxu0 0
    %422 = vmatpush1.bf16.msra.mxu0 0
    %423 = vmatprep.subr.bf16.mxu0 0
    %424 = vmatpush1.bf16.msra.mxu0 0
    %425 = vmatprep.subr.bf16.mxu0 0
    %426 = vmatpush1.bf16.msra.mxu0 0
    %427 = vmatprep.subr.bf16.mxu0 0
    %428 = vmatpush1.bf16.msra.mxu0 0
    %429 = vmatprep.subr.bf16.mxu0 0
    %430 = vmatpush1.bf16.msra.mxu0 0
    %431 = vmatprep.subr.bf16.mxu0 0
    %432 = vmatpush1.bf16.msra.mxu0 0
    %433 = vmatprep.subr.bf16.mxu0 0
    %434 = vmatpush1.bf16.msra.mxu0 0
    %435 = vmatprep.subr.bf16.mxu0 0
    %436 = vmatpush1.bf16.msra.mxu0 0
    %437 = vmatprep.subr.bf16.mxu0 0
    %438 = vmatpush1.bf16.msra.mxu0 0
    %439 = vmatprep.subr.bf16.mxu0 0
    %440 = vmatpush1.bf16.msra.mxu0 0
    %441 = vmatprep.subr.bf16.mxu0 0
    %442 = vmatpush1.bf16.msra.mxu0 0
    %443 = vmatprep.subr.bf16.mxu0 0
    %444 = vmatpush1.bf16.msra.mxu0 0
    %445 = vmatprep.mubr.bf16.mxu0 0
    %446 = vmatmul.mubr.bf16.gmra.mrb[0].mxu0 %v411
    %v447 = vpop.f32.mrb[0].mxu0
    %v448 = vadd.f32 %v383, %v447
    %v449 = vpop.f32.mrb[0].mxu0
    %v450 = vadd.f32 %v387, %v449
    %v451 = vpop.f32.mrb[0].mxu0
    %v452 = vpop.f32.mrb[0].mxu0
    %453 = vdwg.mxu0
    %v454 = vpack.c.bf16 %v448, %v448
    %v455 = vpack.c.bf16 %v450, %v450
    %v456 = vld [vmem:[#allocation14] sm:$0xff]
    %v457 = vld [vmem:[#allocation14 + $0x8] sm:$0xff]
    %v458 = vld [vmem:[#allocation14 + $0x10] sm:$0xff]
    %v459 = vld [vmem:[#allocation14 + $0x18] sm:$0xff]
    %v460 = vld [vmem:[#allocation14 + $0x20] sm:$0xff]
    %v461 = vld [vmem:[#allocation14 + $0x28] sm:$0xff]
    %v462 = vld [vmem:[#allocation14 + $0x30] sm:$0xff]
    %v463 = vld [vmem:[#allocation14 + $0x38] sm:$0xff]
    %v464 = vld [vmem:[#allocation14 + $0x40] sm:$0xff]
    %v465 = vld [vmem:[#allocation14 + $0x48] sm:$0xff]
    %v466 = vld [vmem:[#allocation14 + $0x50] sm:$0xff]
    %v467 = vld [vmem:[#allocation14 + $0x58] sm:$0xff]
    %v468 = vld [vmem:[#allocation14 + $0x60] sm:$0xff]
    %v469 = vld [vmem:[#allocation14 + $0x68] sm:$0xff]
    %v470 = vld [vmem:[#allocation14 + $0x70] sm:$0xff]
    %v471 = vld [vmem:[#allocation14 + $0x78] sm:$0xff]
    %v472 = vld [vmem:[#allocation14 + $0x80] sm:$0xff]
    %v473 = vld [vmem:[#allocation14 + $0x88] sm:$0xff]
    %v474 = vld [vmem:[#allocation14 + $0x90] sm:$0xff]
    %v475 = vld [vmem:[#allocation14 + $0x98] sm:$0xff]
    %v476 = vld [vmem:[#allocation14 + $0xa0] sm:$0xff]
    %v477 = vld [vmem:[#allocation14 + $0xa8] sm:$0xff]
    %v478 = vld [vmem:[#allocation14 + $0xb0] sm:$0xff]
    %v479 = vld [vmem:[#allocation14 + $0xb8] sm:$0xff]
    %v480 = vld [vmem:[#allocation14 + $0xc0] sm:$0xff]
    %v481 = vld [vmem:[#allocation14 + $0xc8] sm:$0xff]
    %v482 = vld [vmem:[#allocation14 + $0xd0] sm:$0xff]
    %v483 = vld [vmem:[#allocation14 + $0xd8] sm:$0xff]
    %v484 = vld [vmem:[#allocation14 + $0xe0] sm:$0xff]
    %v485 = vld [vmem:[#allocation14 + $0xe8] sm:$0xff]
    %v486 = vld [vmem:[#allocation14 + $0xf0] sm:$0xff]
    %v487 = vld [vmem:[#allocation14 + $0xf8] sm:$0xff]
    %v488 = vld [vmem:[#allocation14 + $0x100] sm:$0xff]
    %v489 = vld [vmem:[#allocation14 + $0x108] sm:$0xff]
    %v490 = vld [vmem:[#allocation14 + $0x110] sm:$0xff]
    %v491 = vld [vmem:[#allocation14 + $0x118] sm:$0xff]
    %v492 = vld [vmem:[#allocation14 + $0x120] sm:$0xff]
    %v493 = vld [vmem:[#allocation14 + $0x128] sm:$0xff]
    %v494 = vld [vmem:[#allocation14 + $0x130] sm:$0xff]
    %v495 = vld [vmem:[#allocation14 + $0x138] sm:$0xff]
    %v496 = vld [vmem:[#allocation14 + $0x140] sm:$0xff]
    %v497 = vld [vmem:[#allocation14 + $0x148] sm:$0xff]
    %v498 = vld [vmem:[#allocation14 + $0x150] sm:$0xff]
    %v499 = vld [vmem:[#allocation14 + $0x158] sm:$0xff]
    %v500 = vld [vmem:[#allocation14 + $0x160] sm:$0xff]
    %v501 = vld [vmem:[#allocation14 + $0x168] sm:$0xff]
    %v502 = vld [vmem:[#allocation14 + $0x170] sm:$0xff]
    %v503 = vld [vmem:[#allocation14 + $0x178] sm:$0xff]
    %v504 = vld [vmem:[#allocation14 + $0x180] sm:$0xff]
    %v505 = vld [vmem:[#allocation14 + $0x188] sm:$0xff]
    %v506 = vld [vmem:[#allocation14 + $0x190] sm:$0xff]
    %v507 = vld [vmem:[#allocation14 + $0x198] sm:$0xff]
    %v508 = vld [vmem:[#allocation14 + $0x1a0] sm:$0xff]
    %v509 = vld [vmem:[#allocation14 + $0x1a8] sm:$0xff]
    %v510 = vld [vmem:[#allocation14 + $0x1b0] sm:$0xff]
    %v511 = vld [vmem:[#allocation14 + $0x1b8] sm:$0xff]
    %v512 = vld [vmem:[#allocation14 + $0x1c0] sm:$0xff]
    %v513 = vld [vmem:[#allocation14 + $0x1c8] sm:$0xff]
    %v514 = vld [vmem:[#allocation14 + $0x1d0] sm:$0xff]
    %v515 = vld [vmem:[#allocation14 + $0x1d8] sm:$0xff]
    %v516 = vld [vmem:[#allocation14 + $0x1e0] sm:$0xff]
    %v517 = vld [vmem:[#allocation14 + $0x1e8] sm:$0xff]
    %v518 = vld [vmem:[#allocation14 + $0x1f0] sm:$0xff]
    %v519 = vld [vmem:[#allocation14 + $0x1f8] sm:$0xff]
    %v584 = vunpack.c.l.b16 %v456
    %v585 = vunpack.c.h.b16 %v456
    %v586 = vunpack.c.l.b16 %v457
    %v587 = vunpack.c.h.b16 %v457
    %v588 = vunpack.c.l.b16 %v458
    %v589 = vunpack.c.h.b16 %v458
    %v590 = vunpack.c.l.b16 %v459
    %v591 = vunpack.c.h.b16 %v459
    %v592 = vunpack.c.l.b16 %v460
    %v593 = vunpack.c.h.b16 %v460
    %v594 = vunpack.c.l.b16 %v461
    %v595 = vunpack.c.h.b16 %v461
    %v596 = vunpack.c.l.b16 %v462
    %v597 = vunpack.c.h.b16 %v462
    %v598 = vunpack.c.l.b16 %v463
    %v599 = vunpack.c.h.b16 %v463
    %v600 = vunpack.c.l.b16 %v464
    %v601 = vunpack.c.h.b16 %v464
    %v602 = vunpack.c.l.b16 %v465
    %v603 = vunpack.c.h.b16 %v465
    %v604 = vunpack.c.l.b16 %v466
    %v605 = vunpack.c.h.b16 %v466
    %v606 = vunpack.c.l.b16 %v467
    %v607 = vunpack.c.h.b16 %v467
    %v608 = vunpack.c.l.b16 %v468
    %v609 = vunpack.c.h.b16 %v468
    %v610 = vunpack.c.l.b16 %v469
    %v611 = vunpack.c.h.b16 %v469
    %v612 = vunpack.c.l.b16 %v470
    %v613 = vunpack.c.h.b16 %v470
    %v614 = vunpack.c.l.b16 %v471
    %v615 = vunpack.c.h.b16 %v471
    %v616 = vunpack.c.l.b16 %v472
    %v617 = vunpack.c.h.b16 %v472
    %v618 = vunpack.c.l.b16 %v473
    %v619 = vunpack.c.h.b16 %v473
    %v620 = vunpack.c.l.b16 %v474
    %v621 = vunpack.c.h.b16 %v474
    %v622 = vunpack.c.l.b16 %v475
    %v623 = vunpack.c.h.b16 %v475
    %v624 = vunpack.c.l.b16 %v476
    %v625 = vunpack.c.h.b16 %v476
    %v626 = vunpack.c.l.b16 %v477
    %v627 = vunpack.c.h.b16 %v477
    %v628 = vunpack.c.l.b16 %v478
    %v629 = vunpack.c.h.b16 %v478
    %v630 = vunpack.c.l.b16 %v479
    %v631 = vunpack.c.h.b16 %v479
    %v632 = vunpack.c.l.b16 %v480
    %v633 = vunpack.c.h.b16 %v480
    %v634 = vunpack.c.l.b16 %v481
    %v635 = vunpack.c.h.b16 %v481
    %v636 = vunpack.c.l.b16 %v482
    %v637 = vunpack.c.h.b16 %v482
    %v638 = vunpack.c.l.b16 %v483
    %v639 = vunpack.c.h.b16 %v483
    %v640 = vunpack.c.l.b16 %v484
    %v641 = vunpack.c.h.b16 %v484
    %v642 = vunpack.c.l.b16 %v485
    %v643 = vunpack.c.h.b16 %v485
    %v644 = vunpack.c.l.b16 %v486
    %v645 = vunpack.c.h.b16 %v486
    %v646 = vunpack.c.l.b16 %v487
    %v647 = vunpack.c.h.b16 %v487
    %v648 = vunpack.c.l.b16 %v488
    %v649 = vunpack.c.h.b16 %v488
    %v650 = vunpack.c.l.b16 %v489
    %v651 = vunpack.c.h.b16 %v489
    %v652 = vunpack.c.l.b16 %v490
    %v653 = vunpack.c.h.b16 %v490
    %v654 = vunpack.c.l.b16 %v491
    %v655 = vunpack.c.h.b16 %v491
    %v656 = vunpack.c.l.b16 %v492
    %v657 = vunpack.c.h.b16 %v492
    %v658 = vunpack.c.l.b16 %v493
    %v659 = vunpack.c.h.b16 %v493
    %v660 = vunpack.c.l.b16 %v494
    %v661 = vunpack.c.h.b16 %v494
    %v662 = vunpack.c.l.b16 %v495
    %v663 = vunpack.c.h.b16 %v495
    %v664 = vunpack.c.l.b16 %v496
    %v665 = vunpack.c.h.b16 %v496
    %v666 = vunpack.c.l.b16 %v497
    %v667 = vunpack.c.h.b16 %v497
    %v668 = vunpack.c.l.b16 %v498
    %v669 = vunpack.c.h.b16 %v498
    %v670 = vunpack.c.l.b16 %v499
    %v671 = vunpack.c.h.b16 %v499
    %v672 = vunpack.c.l.b16 %v500
    %v673 = vunpack.c.h.b16 %v500
    %v674 = vunpack.c.l.b16 %v501
    %v675 = vunpack.c.h.b16 %v501
    %v676 = vunpack.c.l.b16 %v502
    %v677 = vunpack.c.h.b16 %v502
    %v678 = vunpack.c.l.b16 %v503
    %v679 = vunpack.c.h.b16 %v503
    %v680 = vunpack.c.l.b16 %v504
    %v681 = vunpack.c.h.b16 %v504
    %v682 = vunpack.c.l.b16 %v505
    %v683 = vunpack.c.h.b16 %v505
    %v684 = vunpack.c.l.b16 %v506
    %v685 = vunpack.c.h.b16 %v506
    %v686 = vunpack.c.l.b16 %v507
    %v687 = vunpack.c.h.b16 %v507
    %v688 = vunpack.c.l.b16 %v508
    %v689 = vunpack.c.h.b16 %v508
    %v690 = vunpack.c.l.b16 %v509
    %v691 = vunpack.c.h.b16 %v509
    %v692 = vunpack.c.l.b16 %v510
    %v693 = vunpack.c.h.b16 %v510
    %v694 = vunpack.c.l.b16 %v511
    %v695 = vunpack.c.h.b16 %v511
    %v696 = vunpack.c.l.b16 %v512
    %v697 = vunpack.c.h.b16 %v512
    %v698 = vunpack.c.l.b16 %v513
    %v699 = vunpack.c.h.b16 %v513
    %v700 = vunpack.c.l.b16 %v514
    %v701 = vunpack.c.h.b16 %v514
    %v702 = vunpack.c.l.b16 %v515
    %v703 = vunpack.c.h.b16 %v515
    %v704 = vunpack.c.l.b16 %v516
    %v705 = vunpack.c.h.b16 %v516
    %v706 = vunpack.c.l.b16 %v517
    %v707 = vunpack.c.h.b16 %v517
    %v708 = vunpack.c.l.b16 %v518
    %v709 = vunpack.c.h.b16 %v518
    %v710 = vunpack.c.l.b16 %v519
    %v711 = vunpack.c.h.b16 %v519
    %v712 = vpack.c.b16 %v588, %v584
    %v713 = vpack.c.b16 %v589, %v585
    %v714 = vpack.c.b16 %v590, %v586
    %v715 = vpack.c.b16 %v591, %v587
    %v716 = vpack.c.b16 %v596, %v592
    %v717 = vpack.c.b16 %v597, %v593
    %v718 = vpack.c.b16 %v598, %v594
    %v719 = vpack.c.b16 %v599, %v595
    %v720 = vpack.c.b16 %v604, %v600
    %v721 = vpack.c.b16 %v605, %v601
    %v722 = vpack.c.b16 %v606, %v602
    %v723 = vpack.c.b16 %v607, %v603
    %v724 = vpack.c.b16 %v612, %v608
    %v725 = vpack.c.b16 %v613, %v609
    %v726 = vpack.c.b16 %v614, %v610
    %v727 = vpack.c.b16 %v615, %v611
    %v728 = vpack.c.b16 %v620, %v616
    %v729 = vpack.c.b16 %v621, %v617
    %v730 = vpack.c.b16 %v622, %v618
    %v731 = vpack.c.b16 %v623, %v619
    %v732 = vpack.c.b16 %v628, %v624
    %v733 = vpack.c.b16 %v629, %v625
    %v734 = vpack.c.b16 %v630, %v626
    %v735 = vpack.c.b16 %v631, %v627
    %v736 = vpack.c.b16 %v636, %v632
    %v737 = vpack.c.b16 %v637, %v633
    %v738 = vpack.c.b16 %v638, %v634
    %v739 = vpack.c.b16 %v639, %v635
    %v740 = vpack.c.b16 %v644, %v640
    %v741 = vpack.c.b16 %v645, %v641
    %v742 = vpack.c.b16 %v646, %v642
    %v743 = vpack.c.b16 %v647, %v643
    %v744 = vpack.c.b16 %v652, %v648
    %v745 = vpack.c.b16 %v653, %v649
    %v746 = vpack.c.b16 %v654, %v650
    %v747 = vpack.c.b16 %v655, %v651
    %v748 = vpack.c.b16 %v660, %v656
    %v749 = vpack.c.b16 %v661, %v657
    %v750 = vpack.c.b16 %v662, %v658
    %v751 = vpack.c.b16 %v663, %v659
    %v752 = vpack.c.b16 %v668, %v664
    %v753 = vpack.c.b16 %v669, %v665
    %v754 = vpack.c.b16 %v670, %v666
    %v755 = vpack.c.b16 %v671, %v667
    %v756 = vpack.c.b16 %v676, %v672
    %v757 = vpack.c.b16 %v677, %v673
    %v758 = vpack.c.b16 %v678, %v674
    %v759 = vpack.c.b16 %v679, %v675
    %v760 = vpack.c.b16 %v684, %v680
    %v761 = vpack.c.b16 %v685, %v681
    %v762 = vpack.c.b16 %v686, %v682
    %v763 = vpack.c.b16 %v687, %v683
    %v764 = vpack.c.b16 %v692, %v688
    %v765 = vpack.c.b16 %v693, %v689
    %v766 = vpack.c.b16 %v694, %v690
    %v767 = vpack.c.b16 %v695, %v691
    %v768 = vpack.c.b16 %v700, %v696
    %v769 = vpack.c.b16 %v701, %v697
    %v770 = vpack.c.b16 %v702, %v698
    %v771 = vpack.c.b16 %v703, %v699
    %v772 = vpack.c.b16 %v708, %v704
    %v773 = vpack.c.b16 %v709, %v705
    %v774 = vpack.c.b16 %v710, %v706
    %v775 = vpack.c.b16 %v711, %v707
    %840 = vmatprep.subr.bf16.mxu0 %v713
    %841 = vmatpush1.bf16.msra.mxu0 %v712
    %842 = vmatprep.subr.bf16.mxu0 %v717
    %843 = vmatpush1.bf16.msra.mxu0 %v716
    %844 = vmatprep.subr.bf16.mxu0 %v721
    %845 = vmatpush1.bf16.msra.mxu0 %v720
    %846 = vmatprep.subr.bf16.mxu0 %v725
    %847 = vmatpush1.bf16.msra.mxu0 %v724
    %848 = vmatprep.subr.bf16.mxu0 %v729
    %849 = vmatpush1.bf16.msra.mxu0 %v728
    %850 = vmatprep.subr.bf16.mxu0 %v733
    %851 = vmatpush1.bf16.msra.mxu0 %v732
    %852 = vmatprep.subr.bf16.mxu0 %v737
    %853 = vmatpush1.bf16.msra.mxu0 %v736
    %854 = vmatprep.subr.bf16.mxu0 %v741
    %855 = vmatpush1.bf16.msra.mxu0 %v740
    %856 = vmatprep.subr.bf16.mxu0 %v745
    %857 = vmatpush1.bf16.msra.mxu0 %v744
    %858 = vmatprep.subr.bf16.mxu0 %v749
    %859 = vmatpush1.bf16.msra.mxu0 %v748
    %860 = vmatprep.subr.bf16.mxu0 %v753
    %861 = vmatpush1.bf16.msra.mxu0 %v752
    %862 = vmatprep.subr.bf16.mxu0 %v757
    %863 = vmatpush1.bf16.msra.mxu0 %v756
    %864 = vmatprep.subr.bf16.mxu0 %v761
    %865 = vmatpush1.bf16.msra.mxu0 %v760
    %866 = vmatprep.subr.bf16.mxu0 %v765
    %867 = vmatpush1.bf16.msra.mxu0 %v764
    %868 = vmatprep.subr.bf16.mxu0 %v769
    %869 = vmatpush1.bf16.msra.mxu0 %v768
    %870 = vmatprep.subr.bf16.mxu0 %v773
    %871 = vmatpush1.bf16.msra.mxu0 %v772
    %872 = vmatprep.mubr.bf16.mxu0 %v455
    %873 = vmatmul.mubr.bf16.gmra.mrb[0].mxu0 %v454
    %v874 = vpop.f32.mrb[0].mxu0
    %v875 = vadd.f32 0.0, %v874
    %v876 = vpop.f32.mrb[0].mxu0
    %v877 = vadd.f32 0.0, %v876
    %v878 = vpop.f32.mrb[0].mxu0
    %v879 = vpop.f32.mrb[0].mxu0
    %880 = vdwg.mxu0
    %881 = vmatprep.subr.bf16.mxu0 %v715
    %882 = vmatpush1.bf16.msra.mxu0 %v714
    %883 = vmatprep.subr.bf16.mxu0 %v719
    %884 = vmatpush1.bf16.msra.mxu0 %v718
    %885 = vmatprep.subr.bf16.mxu0 %v723
    %886 = vmatpush1.bf16.msra.mxu0 %v722
    %887 = vmatprep.subr.bf16.mxu0 %v727
    %888 = vmatpush1.bf16.msra.mxu0 %v726
    %889 = vmatprep.subr.bf16.mxu0 %v731
    %890 = vmatpush1.bf16.msra.mxu0 %v730
    %891 = vmatprep.subr.bf16.mxu0 %v735
    %892 = vmatpush1.bf16.msra.mxu0 %v734
    %893 = vmatprep.subr.bf16.mxu0 %v739
    %894 = vmatpush1.bf16.msra.mxu0 %v738
    %895 = vmatprep.subr.bf16.mxu0 %v743
    %896 = vmatpush1.bf16.msra.mxu0 %v742
    %897 = vmatprep.subr.bf16.mxu0 %v747
    %898 = vmatpush1.bf16.msra.mxu0 %v746
    %899 = vmatprep.subr.bf16.mxu0 %v751
    %900 = vmatpush1.bf16.msra.mxu0 %v750
    %901 = vmatprep.subr.bf16.mxu0 %v755
    %902 = vmatpush1.bf16.msra.mxu0 %v754
    %903 = vmatprep.subr.bf16.mxu0 %v759
    %904 = vmatpush1.bf16.msra.mxu0 %v758
    %905 = vmatprep.subr.bf16.mxu0 %v763
    %906 = vmatpush1.bf16.msra.mxu0 %v762
    %907 = vmatprep.subr.bf16.mxu0 %v767
    %908 = vmatpush1.bf16.msra.mxu0 %v766
    %909 = vmatprep.subr.bf16.mxu0 %v771
    %910 = vmatpush1.bf16.msra.mxu0 %v770
    %911 = vmatprep.subr.bf16.mxu0 %v775
    %912 = vmatpush1.bf16.msra.mxu0 %v774
    %913 = vmatprep.mubr.bf16.mxu0 %v455
    %914 = vmatmul.mubr.bf16.gmra.mrb[0].mxu0 %v454
    %v915 = vpop.f32.mrb[0].mxu0
    %v916 = vadd.f32 0.0, %v915
    %v917 = vpop.f32.mrb[0].mxu0
    %v918 = vadd.f32 0.0, %v917
    %v919 = vpop.f32.mrb[0].mxu0
    %v920 = vpop.f32.mrb[0].mxu0
    %921 = vdwg.mxu0
    %v922 = vpack.c.bf16 %v875, %v875
    %v923 = vpack.c.bf16 %v877, %v877
    %v924 = vpack.c.bf16 %v916, %v916
    %v925 = vpack.c.bf16 %v918, %v918
    %v926 = vld [vmem:[#allocation16] sm:$0xf]
    %v927 = vld [vmem:[#allocation16 + $0x4] sm:$0xf]
    %v928 = vld [vmem:[#allocation16 + $0x8] sm:$0xf]
    %v929 = vld [vmem:[#allocation16 + $0xc] sm:$0xf]
    %v930 = vld [vmem:[#allocation16 + $0x10] sm:$0xf]
    %v931 = vld [vmem:[#allocation16 + $0x14] sm:$0xf]
    %v932 = vld [vmem:[#allocation16 + $0x18] sm:$0xf]
    %v933 = vld [vmem:[#allocation16 + $0x1c] sm:$0xf]
    %v934 = vld [vmem:[#allocation16 + $0x20] sm:$0xf]
    %v935 = vld [vmem:[#allocation16 + $0x24] sm:$0xf]
    %v936 = vld [vmem:[#allocation16 + $0x28] sm:$0xf]
    %v937 = vld [vmem:[#allocation16 + $0x2c] sm:$0xf]
    %v938 = vld [vmem:[#allocation16 + $0x30] sm:$0xf]
    %v939 = vld [vmem:[#allocation16 + $0x34] sm:$0xf]
    %v940 = vld [vmem:[#allocation16 + $0x38] sm:$0xf]
    %v941 = vld [vmem:[#allocation16 + $0x3c] sm:$0xf]
    %v942 = vld [vmem:[#allocation16 + $0x40] sm:$0xf]
    %v943 = vld [vmem:[#allocation16 + $0x44] sm:$0xf]
    %v944 = vld [vmem:[#allocation16 + $0x48] sm:$0xf]
    %v945 = vld [vmem:[#allocation16 + $0x4c] sm:$0xf]
    %v946 = vld [vmem:[#allocation16 + $0x50] sm:$0xf]
    %v947 = vld [vmem:[#allocation16 + $0x54] sm:$0xf]
    %v948 = vld [vmem:[#allocation16 + $0x58] sm:$0xf]
    %v949 = vld [vmem:[#allocation16 + $0x5c] sm:$0xf]
    %v950 = vld [vmem:[#allocation16 + $0x60] sm:$0xf]
    %v951 = vld [vmem:[#allocation16 + $0x64] sm:$0xf]
    %v952 = vld [vmem:[#allocation16 + $0x68] sm:$0xf]
    %v953 = vld [vmem:[#allocation16 + $0x6c] sm:$0xf]
    %v954 = vld [vmem:[#allocation16 + $0x70] sm:$0xf]
    %v955 = vld [vmem:[#allocation16 + $0x74] sm:$0xf]
    %v956 = vld [vmem:[#allocation16 + $0x78] sm:$0xf]
    %v957 = vld [vmem:[#allocation16 + $0x7c] sm:$0xf]
    %v958 = vld [vmem:[#allocation16 + $0x80] sm:$0xf]
    %v959 = vld [vmem:[#allocation16 + $0x84] sm:$0xf]
    %v960 = vld [vmem:[#allocation16 + $0x88] sm:$0xf]
    %v961 = vld [vmem:[#allocation16 + $0x8c] sm:$0xf]
    %v962 = vld [vmem:[#allocation16 + $0x90] sm:$0xf]
    %v963 = vld [vmem:[#allocation16 + $0x94] sm:$0xf]
    %v964 = vld [vmem:[#allocation16 + $0x98] sm:$0xf]
    %v965 = vld [vmem:[#allocation16 + $0x9c] sm:$0xf]
    %v966 = vld [vmem:[#allocation16 + $0xa0] sm:$0xf]
    %v967 = vld [vmem:[#allocation16 + $0xa4] sm:$0xf]
    %v968 = vld [vmem:[#allocation16 + $0xa8] sm:$0xf]
    %v969 = vld [vmem:[#allocation16 + $0xac] sm:$0xf]
    %v970 = vld [vmem:[#allocation16 + $0xb0] sm:$0xf]
    %v971 = vld [vmem:[#allocation16 + $0xb4] sm:$0xf]
    %v972 = vld [vmem:[#allocation16 + $0xb8] sm:$0xf]
    %v973 = vld [vmem:[#allocation16 + $0xbc] sm:$0xf]
    %v974 = vld [vmem:[#allocation16 + $0xc0] sm:$0xf]
    %v975 = vld [vmem:[#allocation16 + $0xc4] sm:$0xf]
    %v976 = vld [vmem:[#allocation16 + $0xc8] sm:$0xf]
    %v977 = vld [vmem:[#allocation16 + $0xcc] sm:$0xf]
    %v978 = vld [vmem:[#allocation16 + $0xd0] sm:$0xf]
    %v979 = vld [vmem:[#allocation16 + $0xd4] sm:$0xf]
    %v980 = vld [vmem:[#allocation16 + $0xd8] sm:$0xf]
    %v981 = vld [vmem:[#allocation16 + $0xdc] sm:$0xf]
    %v982 = vld [vmem:[#allocation16 + $0xe0] sm:$0xf]
    %v983 = vld [vmem:[#allocation16 + $0xe4] sm:$0xf]
    %v984 = vld [vmem:[#allocation16 + $0xe8] sm:$0xf]
    %v985 = vld [vmem:[#allocation16 + $0xec] sm:$0xf]
    %v986 = vld [vmem:[#allocation16 + $0xf0] sm:$0xf]
    %v987 = vld [vmem:[#allocation16 + $0xf4] sm:$0xf]
    %v988 = vld [vmem:[#allocation16 + $0xf8] sm:$0xf]
    %v989 = vld [vmem:[#allocation16 + $0xfc] sm:$0xf]
    %v1054 = vunpack.c.l.b16 %v926
    %v1055 = vunpack.c.l.b16 %v927
    %v1056 = vunpack.c.l.b16 %v928
    %v1057 = vunpack.c.l.b16 %v929
    %v1058 = vunpack.c.l.b16 %v930
    %v1059 = vunpack.c.l.b16 %v931
    %v1060 = vunpack.c.l.b16 %v932
    %v1061 = vunpack.c.l.b16 %v933
    %v1062 = vunpack.c.l.b16 %v934
    %v1063 = vunpack.c.l.b16 %v935
    %v1064 = vunpack.c.l.b16 %v936
    %v1065 = vunpack.c.l.b16 %v937
    %v1066 = vunpack.c.l.b16 %v938
    %v1067 = vunpack.c.l.b16 %v939
    %v1068 = vunpack.c.l.b16 %v940
    %v1069 = vunpack.c.l.b16 %v941
    %v1070 = vunpack.c.l.b16 %v942
    %v1071 = vunpack.c.l.b16 %v943
    %v1072 = vunpack.c.l.b16 %v944
    %v1073 = vunpack.c.l.b16 %v945
    %v1074 = vunpack.c.l.b16 %v946
    %v1075 = vunpack.c.l.b16 %v947
    %v1076 = vunpack.c.l.b16 %v948
    %v1077 = vunpack.c.l.b16 %v949
    %v1078 = vunpack.c.l.b16 %v950
    %v1079 = vunpack.c.l.b16 %v951
    %v1080 = vunpack.c.l.b16 %v952
    %v1081 = vunpack.c.l.b16 %v953
    %v1082 = vunpack.c.l.b16 %v954
    %v1083 = vunpack.c.l.b16 %v955
    %v1084 = vunpack.c.l.b16 %v956
    %v1085 = vunpack.c.l.b16 %v957
    %v1086 = vunpack.c.l.b16 %v958
    %v1087 = vunpack.c.l.b16 %v959
    %v1088 = vunpack.c.l.b16 %v960
    %v1089 = vunpack.c.l.b16 %v961
    %v1090 = vunpack.c.l.b16 %v962
    %v1091 = vunpack.c.l.b16 %v963
    %v1092 = vunpack.c.l.b16 %v964
    %v1093 = vunpack.c.l.b16 %v965
    %v1094 = vunpack.c.l.b16 %v966
    %v1095 = vunpack.c.l.b16 %v967
    %v1096 = vunpack.c.l.b16 %v968
    %v1097 = vunpack.c.l.b16 %v969
    %v1098 = vunpack.c.l.b16 %v970
    %v1099 = vunpack.c.l.b16 %v971
    %v1100 = vunpack.c.l.b16 %v972
    %v1101 = vunpack.c.l.b16 %v973
    %v1102 = vunpack.c.l.b16 %v974
    %v1103 = vunpack.c.l.b16 %v975
    %v1104 = vunpack.c.l.b16 %v976
    %v1105 = vunpack.c.l.b16 %v977
    %v1106 = vunpack.c.l.b16 %v978
    %v1107 = vunpack.c.l.b16 %v979
    %v1108 = vunpack.c.l.b16 %v980
    %v1109 = vunpack.c.l.b16 %v981
    %v1110 = vunpack.c.l.b16 %v982
    %v1111 = vunpack.c.l.b16 %v983
    %v1112 = vunpack.c.l.b16 %v984
    %v1113 = vunpack.c.l.b16 %v985
    %v1114 = vunpack.c.l.b16 %v986
    %v1115 = vunpack.c.l.b16 %v987
    %v1116 = vunpack.c.l.b16 %v988
    %v1117 = vunpack.c.l.b16 %v989
    %v1118 = vpack.c.b16 %v1055, %v1054
    %v1119 = vpack.c.b16 %v1057, %v1056
    %v1120 = vpack.c.b16 %v1059, %v1058
    %v1121 = vpack.c.b16 %v1061, %v1060
    %v1122 = vpack.c.b16 %v1063, %v1062
    %v1123 = vpack.c.b16 %v1065, %v1064
    %v1124 = vpack.c.b16 %v1067, %v1066
    %v1125 = vpack.c.b16 %v1069, %v1068
    %v1126 = vpack.c.b16 %v1071, %v1070
    %v1127 = vpack.c.b16 %v1073, %v1072
    %v1128 = vpack.c.b16 %v1075, %v1074
    %v1129 = vpack.c.b16 %v1077, %v1076
    %v1130 = vpack.c.b16 %v1079, %v1078
    %v1131 = vpack.c.b16 %v1081, %v1080
    %v1132 = vpack.c.b16 %v1083, %v1082
    %v1133 = vpack.c.b16 %v1085, %v1084
    %v1134 = vpack.c.b16 %v1087, %v1086
    %v1135 = vpack.c.b16 %v1089, %v1088
    %v1136 = vpack.c.b16 %v1091, %v1090
    %v1137 = vpack.c.b16 %v1093, %v1092
    %v1138 = vpack.c.b16 %v1095, %v1094
    %v1139 = vpack.c.b16 %v1097, %v1096
    %v1140 = vpack.c.b16 %v1099, %v1098
    %v1141 = vpack.c.b16 %v1101, %v1100
    %v1142 = vpack.c.b16 %v1103, %v1102
    %v1143 = vpack.c.b16 %v1105, %v1104
    %v1144 = vpack.c.b16 %v1107, %v1106
    %v1145 = vpack.c.b16 %v1109, %v1108
    %v1146 = vpack.c.b16 %v1111, %v1110
    %v1147 = vpack.c.b16 %v1113, %v1112
    %v1148 = vpack.c.b16 %v1115, %v1114
    %v1149 = vpack.c.b16 %v1117, %v1116
    %1182 = vmatprep.subr.bf16.mxu0 0
    %1183 = vmatpush1.bf16.msra.mxu0 %v1118
    %1184 = vmatprep.subr.bf16.mxu0 0
    %1185 = vmatpush1.bf16.msra.mxu0 %v1119
    %1186 = vmatprep.subr.bf16.mxu0 0
    %1187 = vmatpush1.bf16.msra.mxu0 %v1120
    %1188 = vmatprep.subr.bf16.mxu0 0
    %1189 = vmatpush1.bf16.msra.mxu0 %v1121
    %1190 = vmatprep.subr.bf16.mxu0 0
    %1191 = vmatpush1.bf16.msra.mxu0 %v1122
    %1192 = vmatprep.subr.bf16.mxu0 0
    %1193 = vmatpush1.bf16.msra.mxu0 %v1123
    %1194 = vmatprep.subr.bf16.mxu0 0
    %1195 = vmatpush1.bf16.msra.mxu0 %v1124
    %1196 = vmatprep.subr.bf16.mxu0 0
    %1197 = vmatpush1.bf16.msra.mxu0 %v1125
    %1198 = vmatprep.subr.bf16.mxu0 0
    %1199 = vmatpush1.bf16.msra.mxu0 %v1126
    %1200 = vmatprep.subr.bf16.mxu0 0
    %1201 = vmatpush1.bf16.msra.mxu0 %v1127
    %1202 = vmatprep.subr.bf16.mxu0 0
    %1203 = vmatpush1.bf16.msra.mxu0 %v1128
    %1204 = vmatprep.subr.bf16.mxu0 0
    %1205 = vmatpush1.bf16.msra.mxu0 %v1129
    %1206 = vmatprep.subr.bf16.mxu0 0
    %1207 = vmatpush1.bf16.msra.mxu0 %v1130
    %1208 = vmatprep.subr.bf16.mxu0 0
    %1209 = vmatpush1.bf16.msra.mxu0 %v1131
    %1210 = vmatprep.subr.bf16.mxu0 0
    %1211 = vmatpush1.bf16.msra.mxu0 %v1132
    %1212 = vmatprep.subr.bf16.mxu0 0
    %1213 = vmatpush1.bf16.msra.mxu0 %v1133
    %1214 = vmatprep.mubr.bf16.mxu0 %v923
    %1215 = vmatmul.mubr.bf16.gmra.mrb[0].mxu0 %v922
    %v1216 = vpop.f32.mrb[0].mxu0
    %v1217 = vadd.f32 0.0, %v1216
    %v1218 = vpop.f32.mrb[0].mxu0
    %v1219 = vpop.f32.mrb[0].mxu0
    %v1220 = vpop.f32.mrb[0].mxu0
    %1221 = vdwg.mxu0
    %1222 = vmatprep.subr.bf16.mxu0 0
    %1223 = vmatpush1.bf16.msra.mxu0 %v1134
    %1224 = vmatprep.subr.bf16.mxu0 0
    %1225 = vmatpush1.bf16.msra.mxu0 %v1135
    %1226 = vmatprep.subr.bf16.mxu0 0
    %1227 = vmatpush1.bf16.msra.mxu0 %v1136
    %1228 = vmatprep.subr.bf16.mxu0 0
    %1229 = vmatpush1.bf16.msra.mxu0 %v1137
    %1230 = vmatprep.subr.bf16.mxu0 0
    %1231 = vmatpush1.bf16.msra.mxu0 %v1138
    %1232 = vmatprep.subr.bf16.mxu0 0
    %1233 = vmatpush1.bf16.msra.mxu0 %v1139
    %1234 = vmatprep.subr.bf16.mxu0 0
    %1235 = vmatpush1.bf16.msra.mxu0 %v1140
    %1236 = vmatprep.subr.bf16.mxu0 0
    %1237 = vmatpush1.bf16.msra.mxu0 %v1141
    %1238 = vmatprep.subr.bf16.mxu0 0
    %1239 = vmatpush1.bf16.msra.mxu0 %v1142
    %1240 = vmatprep.subr.bf16.mxu0 0
    %1241 = vmatpush1.bf16.msra.mxu0 %v1143
    %1242 = vmatprep.subr.bf16.mxu0 0
    %1243 = vmatpush1.bf16.msra.mxu0 %v1144
    %1244 = vmatprep.subr.bf16.mxu0 0
    %1245 = vmatpush1.bf16.msra.mxu0 %v1145
    %1246 = vmatprep.subr.bf16.mxu0 0
    %1247 = vmatpush1.bf16.msra.mxu0 %v1146
    %1248 = vmatprep.subr.bf16.mxu0 0
    %1249 = vmatpush1.bf16.msra.mxu0 %v1147
    %1250 = vmatprep.subr.bf16.mxu0 0
    %1251 = vmatpush1.bf16.msra.mxu0 %v1148
    %1252 = vmatprep.subr.bf16.mxu0 0
    %1253 = vmatpush1.bf16.msra.mxu0 %v1149
    %1254 = vmatprep.mubr.bf16.mxu0 %v925
    %1255 = vmatmul.mubr.bf16.gmra.mrb[0].mxu0 %v924
    %v1256 = vpop.f32.mrb[0].mxu0
    %v1257 = vadd.f32 %v1217, %v1256
    %v1258 = vpop.f32.mrb[0].mxu0
    %v1259 = vpop.f32.mrb[0].mxu0
    %v1260 = vpop.f32.mrb[0].mxu0
    %1261 = vdwg.mxu0
    %v1262 = vpack.c.bf16 %v1257, %v1257
    %v1263 = vld [vmem:[#allocation17] sm:$0xff]
    %v1264 = vld [vmem:[#allocation17 + $0x8] sm:$0xff]
    %v1265 = vld [vmem:[#allocation17 + $0x10] sm:$0xff]
    %v1266 = vld [vmem:[#allocation17 + $0x18] sm:$0xff]
    %v1267 = vld [vmem:[#allocation17 + $0x20] sm:$0xff]
    %v1268 = vld [vmem:[#allocation17 + $0x28] sm:$0xff]
    %v1269 = vld [vmem:[#allocation17 + $0x30] sm:$0xff]
    %v1270 = vld [vmem:[#allocation17 + $0x38] sm:$0xff]
    %v1271 = vld [vmem:[#allocation17 + $0x40] sm:$0xff]
    %v1272 = vld [vmem:[#allocation17 + $0x48] sm:$0xff]
    %v1273 = vld [vmem:[#allocation17 + $0x50] sm:$0xff]
    %v1274 = vld [vmem:[#allocation17 + $0x58] sm:$0xff]
    %v1275 = vld [vmem:[#allocation17 + $0x60] sm:$0xff]
    %v1276 = vld [vmem:[#allocation17 + $0x68] sm:$0xff]
    %v1277 = vld [vmem:[#allocation17 + $0x70] sm:$0xff]
    %v1278 = vld [vmem:[#allocation17 + $0x78] sm:$0xff]
    %v1279 = vld [vmem:[#allocation17 + $0x80] sm:$0xff]
    %v1280 = vld [vmem:[#allocation17 + $0x88] sm:$0xff]
    %v1281 = vld [vmem:[#allocation17 + $0x90] sm:$0xff]
    %v1282 = vld [vmem:[#allocation17 + $0x98] sm:$0xff]
    %v1283 = vld [vmem:[#allocation17 + $0xa0] sm:$0xff]
    %v1284 = vld [vmem:[#allocation17 + $0xa8] sm:$0xff]
    %v1285 = vld [vmem:[#allocation17 + $0xb0] sm:$0xff]
    %v1286 = vld [vmem:[#allocation17 + $0xb8] sm:$0xff]
    %v1287 = vld [vmem:[#allocation17 + $0xc0] sm:$0xff]
    %v1288 = vld [vmem:[#allocation17 + $0xc8] sm:$0xff]
    %v1289 = vld [vmem:[#allocation17 + $0xd0] sm:$0xff]
    %v1290 = vld [vmem:[#allocation17 + $0xd8] sm:$0xff]
    %v1291 = vld [vmem:[#allocation17 + $0xe0] sm:$0xff]
    %v1292 = vld [vmem:[#allocation17 + $0xe8] sm:$0xff]
    %v1293 = vld [vmem:[#allocation17 + $0xf0] sm:$0xff]
    %v1294 = vld [vmem:[#allocation17 + $0xf8] sm:$0xff]
    %v1327 = vunpack.c.l.b16 %v1263
    %v1328 = vunpack.c.h.b16 %v1263
    %v1329 = vunpack.c.l.b16 %v1264
    %v1330 = vunpack.c.h.b16 %v1264
    %v1331 = vunpack.c.l.b16 %v1265
    %v1332 = vunpack.c.h.b16 %v1265
    %v1333 = vunpack.c.l.b16 %v1266
    %v1334 = vunpack.c.h.b16 %v1266
    %v1335 = vunpack.c.l.b16 %v1267
    %v1336 = vunpack.c.h.b16 %v1267
    %v1337 = vunpack.c.l.b16 %v1268
    %v1338 = vunpack.c.h.b16 %v1268
    %v1339 = vunpack.c.l.b16 %v1269
    %v1340 = vunpack.c.h.b16 %v1269
    %v1341 = vunpack.c.l.b16 %v1270
    %v1342 = vunpack.c.h.b16 %v1270
    %v1343 = vunpack.c.l.b16 %v1271
    %v1344 = vunpack.c.h.b16 %v1271
    %v1345 = vunpack.c.l.b16 %v1272
    %v1346 = vunpack.c.h.b16 %v1272
    %v1347 = vunpack.c.l.b16 %v1273
    %v1348 = vunpack.c.h.b16 %v1273
    %v1349 = vunpack.c.l.b16 %v1274
    %v1350 = vunpack.c.h.b16 %v1274
    %v1351 = vunpack.c.l.b16 %v1275
    %v1352 = vunpack.c.h.b16 %v1275
    %v1353 = vunpack.c.l.b16 %v1276
    %v1354 = vunpack.c.h.b16 %v1276
    %v1355 = vunpack.c.l.b16 %v1277
    %v1356 = vunpack.c.h.b16 %v1277
    %v1357 = vunpack.c.l.b16 %v1278
    %v1358 = vunpack.c.h.b16 %v1278
    %v1359 = vunpack.c.l.b16 %v1279
    %v1360 = vunpack.c.h.b16 %v1279
    %v1361 = vunpack.c.l.b16 %v1280
    %v1362 = vunpack.c.h.b16 %v1280
    %v1363 = vunpack.c.l.b16 %v1281
    %v1364 = vunpack.c.h.b16 %v1281
    %v1365 = vunpack.c.l.b16 %v1282
    %v1366 = vunpack.c.h.b16 %v1282
    %v1367 = vunpack.c.l.b16 %v1283
    %v1368 = vunpack.c.h.b16 %v1283
    %v1369 = vunpack.c.l.b16 %v1284
    %v1370 = vunpack.c.h.b16 %v1284
    %v1371 = vunpack.c.l.b16 %v1285
    %v1372 = vunpack.c.h.b16 %v1285
    %v1373 = vunpack.c.l.b16 %v1286
    %v1374 = vunpack.c.h.b16 %v1286
    %v1375 = vunpack.c.l.b16 %v1287
    %v1376 = vunpack.c.h.b16 %v1287
    %v1377 = vunpack.c.l.b16 %v1288
    %v1378 = vunpack.c.h.b16 %v1288
    %v1379 = vunpack.c.l.b16 %v1289
    %v1380 = vunpack.c.h.b16 %v1289
    %v1381 = vunpack.c.l.b16 %v1290
    %v1382 = vunpack.c.h.b16 %v1290
    %v1383 = vunpack.c.l.b16 %v1291
    %v1384 = vunpack.c.h.b16 %v1291
    %v1385 = vunpack.c.l.b16 %v1292
    %v1386 = vunpack.c.h.b16 %v1292
    %v1387 = vunpack.c.l.b16 %v1293
    %v1388 = vunpack.c.h.b16 %v1293
    %v1389 = vunpack.c.l.b16 %v1294
    %v1390 = vunpack.c.h.b16 %v1294
    %v1391 = vpack.c.b16 %v1331, %v1327
    %v1392 = vpack.c.b16 %v1332, %v1328
    %v1393 = vpack.c.b16 %v1333, %v1329
    %v1394 = vpack.c.b16 %v1334, %v1330
    %v1395 = vpack.c.b16 %v1339, %v1335
    %v1396 = vpack.c.b16 %v1340, %v1336
    %v1397 = vpack.c.b16 %v1341, %v1337
    %v1398 = vpack.c.b16 %v1342, %v1338
    %v1399 = vpack.c.b16 %v1347, %v1343
    %v1400 = vpack.c.b16 %v1348, %v1344
    %v1401 = vpack.c.b16 %v1349, %v1345
    %v1402 = vpack.c.b16 %v1350, %v1346
    %v1403 = vpack.c.b16 %v1355, %v1351
    %v1404 = vpack.c.b16 %v1356, %v1352
    %v1405 = vpack.c.b16 %v1357, %v1353
    %v1406 = vpack.c.b16 %v1358, %v1354
    %v1407 = vpack.c.b16 %v1363, %v1359
    %v1408 = vpack.c.b16 %v1364, %v1360
    %v1409 = vpack.c.b16 %v1365, %v1361
    %v1410 = vpack.c.b16 %v1366, %v1362
    %v1411 = vpack.c.b16 %v1371, %v1367
    %v1412 = vpack.c.b16 %v1372, %v1368
    %v1413 = vpack.c.b16 %v1373, %v1369
    %v1414 = vpack.c.b16 %v1374, %v1370
    %v1415 = vpack.c.b16 %v1379, %v1375
    %v1416 = vpack.c.b16 %v1380, %v1376
    %v1417 = vpack.c.b16 %v1381, %v1377
    %v1418 = vpack.c.b16 %v1382, %v1378
    %v1419 = vpack.c.b16 %v1387, %v1383
    %v1420 = vpack.c.b16 %v1388, %v1384
    %v1421 = vpack.c.b16 %v1389, %v1385
    %v1422 = vpack.c.b16 %v1390, %v1386
    %1455 = vmatprep.subr.bf16.mxu0 %v1392
    %1456 = vmatpush1.bf16.msra.mxu0 %v1391
    %1457 = vmatprep.subr.bf16.mxu0 %v1396
    %1458 = vmatpush1.bf16.msra.mxu0 %v1395
    %1459 = vmatprep.subr.bf16.mxu0 %v1400
    %1460 = vmatpush1.bf16.msra.mxu0 %v1399
    %1461 = vmatprep.subr.bf16.mxu0 %v1404
    %1462 = vmatpush1.bf16.msra.mxu0 %v1403
    %1463 = vmatprep.subr.bf16.mxu0 %v1408
    %1464 = vmatpush1.bf16.msra.mxu0 %v1407
    %1465 = vmatprep.subr.bf16.mxu0 %v1412
    %1466 = vmatpush1.bf16.msra.mxu0 %v1411
    %1467 = vmatprep.subr.bf16.mxu0 %v1416
    %1468 = vmatpush1.bf16.msra.mxu0 %v1415
    %1469 = vmatprep.subr.bf16.mxu0 %v1420
    %1470 = vmatpush1.bf16.msra.mxu0 %v1419
    %1471 = vmatprep.subr.bf16.mxu0 0
    %1472 = vmatpush1.bf16.msra.mxu0 0
    %1473 = vmatprep.subr.bf16.mxu0 0
    %1474 = vmatpush1.bf16.msra.mxu0 0
    %1475 = vmatprep.subr.bf16.mxu0 0
    %1476 = vmatpush1.bf16.msra.mxu0 0
    %1477 = vmatprep.subr.bf16.mxu0 0
    %1478 = vmatpush1.bf16.msra.mxu0 0
    %1479 = vmatprep.subr.bf16.mxu0 0
    %1480 = vmatpush1.bf16.msra.mxu0 0
    %1481 = vmatprep.subr.bf16.mxu0 0
    %1482 = vmatpush1.bf16.msra.mxu0 0
    %1483 = vmatprep.subr.bf16.mxu0 0
    %1484 = vmatpush1.bf16.msra.mxu0 0
    %1485 = vmatprep.subr.bf16.mxu0 0
    %1486 = vmatpush1.bf16.msra.mxu0 0
    %1487 = vmatprep.mubr.bf16.mxu0 0
    %1488 = vmatmul.mubr.bf16.gmra.mrb[0].mxu0 %v1262
    %v1489 = vpop.f32.mrb[0].mxu0
    %v1490 = vadd.f32 0.0, %v1489
    %v1491 = vpop.f32.mrb[0].mxu0
    %v1492 = vadd.f32 0.0, %v1491
    %v1493 = vpop.f32.mrb[0].mxu0
    %v1494 = vpop.f32.mrb[0].mxu0
    %1495 = vdwg.mxu0
    %1496 = vmatprep.subr.bf16.mxu0 %v1394
    %1497 = vmatpush1.bf16.msra.mxu0 %v1393
    %1498 = vmatprep.subr.bf16.mxu0 %v1398
    %1499 = vmatpush1.bf16.msra.mxu0 %v1397
    %1500 = vmatprep.subr.bf16.mxu0 %v1402
    %1501 = vmatpush1.bf16.msra.mxu0 %v1401
    %1502 = vmatprep.subr.bf16.mxu0 %v1406
    %1503 = vmatpush1.bf16.msra.mxu0 %v1405
    %1504 = vmatprep.subr.bf16.mxu0 %v1410
    %1505 = vmatpush1.bf16.msra.mxu0 %v1409
    %1506 = vmatprep.subr.bf16.mxu0 %v1414
    %1507 = vmatpush1.bf16.msra.mxu0 %v1413
    %1508 = vmatprep.subr.bf16.mxu0 %v1418
    %1509 = vmatpush1.bf16.msra.mxu0 %v1417
    %1510 = vmatprep.subr.bf16.mxu0 %v1422
    %1511 = vmatpush1.bf16.msra.mxu0 %v1421
    %1512 = vmatprep.subr.bf16.mxu0 0
    %1513 = vmatpush1.bf16.msra.mxu0 0
    %1514 = vmatprep.subr.bf16.mxu0 0
    %1515 = vmatpush1.bf16.msra.mxu0 0
    %1516 = vmatprep.subr.bf16.mxu0 0
    %1517 = vmatpush1.bf16.msra.mxu0 0
    %1518 = vmatprep.subr.bf16.mxu0 0
    %1519 = vmatpush1.bf16.msra.mxu0 0
    %1520 = vmatprep.subr.bf16.mxu0 0
    %1521 = vmatpush1.bf16.msra.mxu0 0
    %1522 = vmatprep.subr.bf16.mxu0 0
    %1523 = vmatpush1.bf16.msra.mxu0 0
    %1524 = vmatprep.subr.bf16.mxu0 0
    %1525 = vmatpush1.bf16.msra.mxu0 0
    %1526 = vmatprep.subr.bf16.mxu0 0
    %1527 = vmatpush1.bf16.msra.mxu0 0
    %1528 = vmatprep.mubr.bf16.mxu0 0
    %1529 = vmatmul.mubr.bf16.gmra.mrb[0].mxu0 %v1262
    %v1530 = vpop.f32.mrb[0].mxu0
    %v1531 = vadd.f32 0.0, %v1530
    %v1532 = vpop.f32.mrb[0].mxu0
    %v1533 = vadd.f32 0.0, %v1532
    %v1534 = vpop.f32.mrb[0].mxu0
    %v1535 = vpop.f32.mrb[0].mxu0
    %1536 = vdwg.mxu0
    %v1537 = vsub.f32 %v875, %v1490
    %v1538 = vsub.f32 %v877, %v1492
    %v1539 = vsub.f32 %v916, %v1531
    %v1540 = vsub.f32 %v918, %v1533
    %v1541 = vmul.f32 %v1537, %v1537
    %v1542 = vmul.f32 %v1538, %v1538
    %v1543 = vmul.f32 %v1539, %v1539
    %v1544 = vmul.f32 %v1540, %v1540
    %v1545 = vpack.c.bf16 %v1541, %v1541
    %v1546 = vpack.c.bf16 %v1542, %v1542
    %v1547 = vpack.c.bf16 %v1543, %v1543
    %v1548 = vpack.c.bf16 %v1544, %v1544
    %1549 = vmatprep.subr.bf16.mxu0 0
    %1550 = vmatpush1.bf16.msra.mxu0 %v1118
    %1551 = vmatprep.subr.bf16.mxu0 0
    %1552 = vmatpush1.bf16.msra.mxu0 %v1119
    %1553 = vmatprep.subr.bf16.mxu0 0
    %1554 = vmatpush1.bf16.msra.mxu0 %v1120
    %1555 = vmatprep.subr.bf16.mxu0 0
    %1556 = vmatpush1.bf16.msra.mxu0 %v1121
    %1557 = vmatprep.subr.bf16.mxu0 0
    %1558 = vmatpush1.bf16.msra.mxu0 %v1122
    %1559 = vmatprep.subr.bf16.mxu0 0
    %1560 = vmatpush1.bf16.msra.mxu0 %v1123
    %1561 = vmatprep.subr.bf16.mxu0 0
    %1562 = vmatpush1.bf16.msra.mxu0 %v1124
    %1563 = vmatprep.subr.bf16.mxu0 0
    %1564 = vmatpush1.bf16.msra.mxu0 %v1125
    %1565 = vmatprep.subr.bf16.mxu0 0
    %1566 = vmatpush1.bf16.msra.mxu0 %v1126
    %1567 = vmatprep.subr.bf16.mxu0 0
    %1568 = vmatpush1.bf16.msra.mxu0 %v1127
    %1569 = vmatprep.subr.bf16.mxu0 0
    %1570 = vmatpush1.bf16.msra.mxu0 %v1128
    %1571 = vmatprep.subr.bf16.mxu0 0
    %1572 = vmatpush1.bf16.msra.mxu0 %v1129
    %1573 = vmatprep.subr.bf16.mxu0 0
    %1574 = vmatpush1.bf16.msra.mxu0 %v1130
    %1575 = vmatprep.subr.bf16.mxu0 0
    %1576 = vmatpush1.bf16.msra.mxu0 %v1131
    %1577 = vmatprep.subr.bf16.mxu0 0
    %1578 = vmatpush1.bf16.msra.mxu0 %v1132
    %1579 = vmatprep.subr.bf16.mxu0 0
    %1580 = vmatpush1.bf16.msra.mxu0 %v1133
    %1581 = vmatprep.mubr.bf16.mxu0 %v1546
    %1582 = vmatmul.mubr.bf16.gmra.mrb[0].mxu0 %v1545
    %v1583 = vpop.f32.mrb[0].mxu0
    %v1584 = vadd.f32 0.001, %v1583
    %v1585 = vpop.f32.mrb[0].mxu0
    %v1586 = vpop.f32.mrb[0].mxu0
    %v1587 = vpop.f32.mrb[0].mxu0
    %1588 = vdwg.mxu0
    %1589 = vmatprep.subr.bf16.mxu0 0
    %1590 = vmatpush1.bf16.msra.mxu0 %v1134
    %1591 = vmatprep.subr.bf16.mxu0 0
    %1592 = vmatpush1.bf16.msra.mxu0 %v1135
    %1593 = vmatprep.subr.bf16.mxu0 0
    %1594 = vmatpush1.bf16.msra.mxu0 %v1136
    %1595 = vmatprep.subr.bf16.mxu0 0
    %1596 = vmatpush1.bf16.msra.mxu0 %v1137
    %1597 = vmatprep.subr.bf16.mxu0 0
    %1598 = vmatpush1.bf16.msra.mxu0 %v1138
    %1599 = vmatprep.subr.bf16.mxu0 0
    %1600 = vmatpush1.bf16.msra.mxu0 %v1139
    %1601 = vmatprep.subr.bf16.mxu0 0
    %1602 = vmatpush1.bf16.msra.mxu0 %v1140
    %1603 = vmatprep.subr.bf16.mxu0 0
    %1604 = vmatpush1.bf16.msra.mxu0 %v1141
    %1605 = vmatprep.subr.bf16.mxu0 0
    %1606 = vmatpush1.bf16.msra.mxu0 %v1142
    %1607 = vmatprep.subr.bf16.mxu0 0
    %1608 = vmatpush1.bf16.msra.mxu0 %v1143
    %1609 = vmatprep.subr.bf16.mxu0 0
    %1610 = vmatpush1.bf16.msra.mxu0 %v1144
    %1611 = vmatprep.subr.bf16.mxu0 0
    %1612 = vmatpush1.bf16.msra.mxu0 %v1145
    %1613 = vmatprep.subr.bf16.mxu0 0
    %1614 = vmatpush1.bf16.msra.mxu0 %v1146
    %1615 = vmatprep.subr.bf16.mxu0 0
    %1616 = vmatpush1.bf16.msra.mxu0 %v1147
    %1617 = vmatprep.subr.bf16.mxu0 0
    %1618 = vmatpush1.bf16.msra.mxu0 %v1148
    %1619 = vmatprep.subr.bf16.mxu0 0
    %1620 = vmatpush1.bf16.msra.mxu0 %v1149
    %1621 = vmatprep.mubr.bf16.mxu0 %v1548
    %1622 = vmatmul.mubr.bf16.gmra.mrb[0].mxu0 %v1547
    %v1623 = vpop.f32.mrb[0].mxu0
    %v1624 = vadd.f32 %v1584, %v1623
    %v1625 = vpop.f32.mrb[0].mxu0
    %v1626 = vpop.f32.mrb[0].mxu0
    %v1627 = vpop.f32.mrb[0].mxu0
    %1628 = vdwg.mxu0
    %v1629 = vrsqrt.pop %v1624
    %v1630 = vpack.c.bf16 %v1629, %v1629
    %1631 = vmatprep.subr.bf16.mxu0 %v1392
    %1632 = vmatpush1.bf16.msra.mxu0 %v1391
    %1633 = vmatprep.subr.bf16.mxu0 %v1396
    %1634 = vmatpush1.bf16.msra.mxu0 %v1395
    %1635 = vmatprep.subr.bf16.mxu0 %v1400
    %1636 = vmatpush1.bf16.msra.mxu0 %v1399
    %1637 = vmatprep.subr.bf16.mxu0 %v1404
    %1638 = vmatpush1.bf16.msra.mxu0 %v1403
    %1639 = vmatprep.subr.bf16.mxu0 %v1408
    %1640 = vmatpush1.bf16.msra.mxu0 %v1407
    %1641 = vmatprep.subr.bf16.mxu0 %v1412
    %1642 = vmatpush1.bf16.msra.mxu0 %v1411
    %1643 = vmatprep.subr.bf16.mxu0 %v1416
    %1644 = vmatpush1.bf16.msra.mxu0 %v1415
    %1645 = vmatprep.subr.bf16.mxu0 %v1420
    %1646 = vmatpush1.bf16.msra.mxu0 %v1419
    %1647 = vmatprep.subr.bf16.mxu0 0
    %1648 = vmatpush1.bf16.msra.mxu0 0
    %1649 = vmatprep.subr.bf16.mxu0 0
    %1650 = vmatpush1.bf16.msra.mxu0 0
    %1651 = vmatprep.subr.bf16.mxu0 0
    %1652 = vmatpush1.bf16.msra.mxu0 0
    %1653 = vmatprep.subr.bf16.mxu0 0
    %1654 = vmatpush1.bf16.msra.mxu0 0
    %1655 = vmatprep.subr.bf16.mxu0 0
    %1656 = vmatpush1.bf16.msra.mxu0 0
    %1657 = vmatprep.subr.bf16.mxu0 0
    %1658 = vmatpush1.bf16.msra.mxu0 0
    %1659 = vmatprep.subr.bf16.mxu0 0
    %1660 = vmatpush1.bf16.msra.mxu0 0
    %1661 = vmatprep.subr.bf16.mxu0 0
    %1662 = vmatpush1.bf16.msra.mxu0 0
    %1663 = vmatprep.mubr.bf16.mxu0 0
    %1664 = vmatmul.mubr.bf16.gmra.mrb[0].mxu0 %v1630
    %v1665 = vpop.f32.mrb[0].mxu0
    %v1666 = vadd.f32 0.0, %v1665
    %v1667 = vpop.f32.mrb[0].mxu0
    %v1668 = vadd.f32 0.0, %v1667
    %v1669 = vpop.f32.mrb[0].mxu0
    %v1670 = vpop.f32.mrb[0].mxu0
    %1671 = vdwg.mxu0
    %1672 = vmatprep.subr.bf16.mxu0 %v1394
    %1673 = vmatpush1.bf16.msra.mxu0 %v1393
    %1674 = vmatprep.subr.bf16.mxu0 %v1398
    %1675 = vmatpush1.bf16.msra.mxu0 %v1397
    %1676 = vmatprep.subr.bf16.mxu0 %v1402
    %1677 = vmatpush1.bf16.msra.mxu0 %v1401
    %1678 = vmatprep.subr.bf16.mxu0 %v1406
    %1679 = vmatpush1.bf16.msra.mxu0 %v1405
    %1680 = vmatprep.subr.bf16.mxu0 %v1410
    %1681 = vmatpush1.bf16.msra.mxu0 %v1409
    %1682 = vmatprep.subr.bf16.mxu0 %v1414
    %1683 = vmatpush1.bf16.msra.mxu0 %v1413
    %1684 = vmatprep.subr.bf16.mxu0 %v1418
    %1685 = vmatpush1.bf16.msra.mxu0 %v1417
    %1686 = vmatprep.subr.bf16.mxu0 %v1422
    %1687 = vmatpush1.bf16.msra.mxu0 %v1421
    %1688 = vmatprep.subr.bf16.mxu0 0
    %1689 = vmatpush1.bf16.msra.mxu0 0
    %1690 = vmatprep.subr.bf16.mxu0 0
    %1691 = vmatpush1.bf16.msra.mxu0 0
    %1692 = vmatprep.subr.bf16.mxu0 0
    %1693 = vmatpush1.bf16.msra.mxu0 0
    %1694 = vmatprep.subr.bf16.mxu0 0
    %1695 = vmatpush1.bf16.msra.mxu0 0
    %1696 = vmatprep.subr.bf16.mxu0 0
    %1697 = vmatpush1.bf16.msra.mxu0 0
    %1698 = vmatprep.subr.bf16.mxu0 0
    %1699 = vmatpush1.bf16.msra.mxu0 0
    %1700 = vmatprep.subr.bf16.mxu0 0
    %1701 = vmatpush1.bf16.msra.mxu0 0
    %1702 = vmatprep.subr.bf16.mxu0 0
    %1703 = vmatpush1.bf16.msra.mxu0 0
    %1704 = vmatprep.mubr.bf16.mxu0 0
    %1705 = vmatmul.mubr.bf16.gmra.mrb[0].mxu0 %v1630
    %v1706 = vpop.f32.mrb[0].mxu0
    %v1707 = vadd.f32 0.0, %v1706
    %v1708 = vpop.f32.mrb[0].mxu0
    %v1709 = vadd.f32 0.0, %v1708
    %v1710 = vpop.f32.mrb[0].mxu0
    %v1711 = vpop.f32.mrb[0].mxu0
    %1712 = vdwg.mxu0
    %v1713 = vmul.f32 %v1537, %v1666
    %v1714 = vmul.f32 %v1538, %v1668
    %v1715 = vmul.f32 %v1539, %v1707
    %v1716 = vmul.f32 %v1540, %v1709
    %v1717 = vld [vmem:[#allocation19] sm:$0xf]
    %v1719 = vlaneseq
    %v1720 = vshrl.u32 %v1719, 7
    %v1721 = vsub.s32 0, %v1720
    %v1722 = vrot.slane %v1717, %v1721
    %v1723 = vlaneseq
    %v1724 = vshrl.u32 %v1723, 7
    %v1725 = vsub.s32 1, %v1724
    %v1726 = vrot.slane %v1717, %v1725
    %v1727 = vlaneseq
    %v1728 = vshrl.u32 %v1727, 7
    %v1729 = vsub.s32 2, %v1728
    %v1730 = vrot.slane %v1717, %v1729
    %v1731 = vlaneseq
    %v1732 = vshrl.u32 %v1731, 7
    %v1733 = vsub.s32 3, %v1732
    %v1734 = vrot.slane %v1717, %v1733
    %v1739 = vmul.f32 %v1713, %v1722
    %v1740 = vmul.f32 %v1714, %v1726
    %v1741 = vmul.f32 %v1715, %v1730
    %v1742 = vmul.f32 %v1716, %v1734
    %v1743 = vld [vmem:[#allocation20] sm:$0xf]
    %v1745 = vlaneseq
    %v1746 = vshrl.u32 %v1745, 7
    %v1747 = vsub.s32 0, %v1746
    %v1748 = vrot.slane %v1743, %v1747
    %v1749 = vlaneseq
    %v1750 = vshrl.u32 %v1749, 7
    %v1751 = vsub.s32 1, %v1750
    %v1752 = vrot.slane %v1743, %v1751
    %v1753 = vlaneseq
    %v1754 = vshrl.u32 %v1753, 7
    %v1755 = vsub.s32 2, %v1754
    %v1756 = vrot.slane %v1743, %v1755
    %v1757 = vlaneseq
    %v1758 = vshrl.u32 %v1757, 7
    %v1759 = vsub.s32 3, %v1758
    %v1760 = vrot.slane %v1743, %v1759
    %v1765 = vadd.f32 %v1739, %v1748
    %v1766 = vadd.f32 %v1740, %v1752
    %v1767 = vadd.f32 %v1741, %v1756
    %v1768 = vadd.f32 %v1742, %v1760
    %vm1769 = vcmp.gt.f32.partialorder %v1765, 0.0
    %vm1770 = vcmp.gt.f32.partialorder %v1766, 0.0
    %vm1771 = vcmp.gt.f32.partialorder %v1767, 0.0
    %vm1772 = vcmp.gt.f32.partialorder %v1768, 0.0
    %v1773 = vmin.f32 %v1765, 0.0
    %v1774 = vmin.f32 %v1766, 0.0
    %v1775 = vmin.f32 %v1767, 0.0
    %v1776 = vmin.f32 %v1768, 0.0
    %v1777 = vmul.f32 %v1773, 1.442695
    %v1778 = vpow.pop %v1777
    %v1779 = vmul.f32 %v1774, 1.442695
    %v1780 = vpow.pop %v1779
    %v1781 = vmul.f32 %v1775, 1.442695
    %v1782 = vpow.pop %v1781
    %v1783 = vmul.f32 %v1776, 1.442695
    %v1784 = vpow.pop %v1783
    %v1785 = vsub.f32 %v1778, 1.0
    %v1786 = vsub.f32 %v1780, 1.0
    %v1787 = vsub.f32 %v1782, 1.0
    %v1788 = vsub.f32 %v1784, 1.0
    %v1789 = vsel %vm1769, %v1765, %v1785
    %v1790 = vsel %vm1770, %v1766, %v1786
    %v1791 = vsel %vm1771, %v1767, %v1787
    %v1792 = vsel %vm1772, %v1768, %v1788
    %v1793 = vpack.c.bf16 %v1789, %v1789
    %v1794 = vpack.c.bf16 %v1790, %v1790
    %v1795 = vpack.c.bf16 %v1791, %v1791
    %v1796 = vpack.c.bf16 %v1792, %v1792
    %v1797 = vld [vmem:[#allocation22] sm:$0xff]
    %v1798 = vld [vmem:[#allocation22 + $0x8] sm:$0xff]
    %v1799 = vld [vmem:[#allocation22 + $0x10] sm:$0xff]
    %v1800 = vld [vmem:[#allocation22 + $0x18] sm:$0xff]
    %v1801 = vld [vmem:[#allocation22 + $0x20] sm:$0xff]
    %v1802 = vld [vmem:[#allocation22 + $0x28] sm:$0xff]
    %v1803 = vld [vmem:[#allocation22 + $0x30] sm:$0xff]
    %v1804 = vld [vmem:[#allocation22 + $0x38] sm:$0xff]
    %v1805 = vld [vmem:[#allocation22 + $0x40] sm:$0xff]
    %v1806 = vld [vmem:[#allocation22 + $0x48] sm:$0xff]
    %v1807 = vld [vmem:[#allocation22 + $0x50] sm:$0xff]
    %v1808 = vld [vmem:[#allocation22 + $0x58] sm:$0xff]
    %v1809 = vld [vmem:[#allocation22 + $0x60] sm:$0xff]
    %v1810 = vld [vmem:[#allocation22 + $0x68] sm:$0xff]
    %v1811 = vld [vmem:[#allocation22 + $0x70] sm:$0xff]
    %v1812 = vld [vmem:[#allocation22 + $0x78] sm:$0xff]
    %v1813 = vld [vmem:[#allocation22 + $0x80] sm:$0xff]
    %v1814 = vld [vmem:[#allocation22 + $0x88] sm:$0xff]
    %v1815 = vld [vmem:[#allocation22 + $0x90] sm:$0xff]
    %v1816 = vld [vmem:[#allocation22 + $0x98] sm:$0xff]
    %v1817 = vld [vmem:[#allocation22 + $0xa0] sm:$0xff]
    %v1818 = vld [vmem:[#allocation22 + $0xa8] sm:$0xff]
    %v1819 = vld [vmem:[#allocation22 + $0xb0] sm:$0xff]
    %v1820 = vld [vmem:[#allocation22 + $0xb8] sm:$0xff]
    %v1821 = vld [vmem:[#allocation22 + $0xc0] sm:$0xff]
    %v1822 = vld [vmem:[#allocation22 + $0xc8] sm:$0xff]
    %v1823 = vld [vmem:[#allocation22 + $0xd0] sm:$0xff]
    %v1824 = vld [vmem:[#allocation22 + $0xd8] sm:$0xff]
    %v1825 = vld [vmem:[#allocation22 + $0xe0] sm:$0xff]
    %v1826 = vld [vmem:[#allocation22 + $0xe8] sm:$0xff]
    %v1827 = vld [vmem:[#allocation22 + $0xf0] sm:$0xff]
    %v1828 = vld [vmem:[#allocation22 + $0xf8] sm:$0xff]
    %v1829 = vld [vmem:[#allocation22 + $0x100] sm:$0xff]
    %v1830 = vld [vmem:[#allocation22 + $0x108] sm:$0xff]
    %v1831 = vld [vmem:[#allocation22 + $0x110] sm:$0xff]
    %v1832 = vld [vmem:[#allocation22 + $0x118] sm:$0xff]
    %v1833 = vld [vmem:[#allocation22 + $0x120] sm:$0xff]
    %v1834 = vld [vmem:[#allocation22 + $0x128] sm:$0xff]
    %v1835 = vld [vmem:[#allocation22 + $0x130] sm:$0xff]
    %v1836 = vld [vmem:[#allocation22 + $0x138] sm:$0xff]
    %v1837 = vld [vmem:[#allocation22 + $0x140] sm:$0xff]
    %v1838 = vld [vmem:[#allocation22 + $0x148] sm:$0xff]
    %v1839 = vld [vmem:[#allocation22 + $0x150] sm:$0xff]
    %v1840 = vld [vmem:[#allocation22 + $0x158] sm:$0xff]
    %v1841 = vld [vmem:[#allocation22 + $0x160] sm:$0xff]
    %v1842 = vld [vmem:[#allocation22 + $0x168] sm:$0xff]
    %v1843 = vld [vmem:[#allocation22 + $0x170] sm:$0xff]
    %v1844 = vld [vmem:[#allocation22 + $0x178] sm:$0xff]
    %v1845 = vld [vmem:[#allocation22 + $0x180] sm:$0xff]
    %v1846 = vld [vmem:[#allocation22 + $0x188] sm:$0xff]
    %v1847 = vld [vmem:[#allocation22 + $0x190] sm:$0xff]
    %v1848 = vld [vmem:[#allocation22 + $0x198] sm:$0xff]
    %v1849 = vld [vmem:[#allocation22 + $0x1a0] sm:$0xff]
    %v1850 = vld [vmem:[#allocation22 + $0x1a8] sm:$0xff]
    %v1851 = vld [vmem:[#allocation22 + $0x1b0] sm:$0xff]
    %v1852 = vld [vmem:[#allocation22 + $0x1b8] sm:$0xff]
    %v1853 = vld [vmem:[#allocation22 + $0x1c0] sm:$0xff]
    %v1854 = vld [vmem:[#allocation22 + $0x1c8] sm:$0xff]
    %v1855 = vld [vmem:[#allocation22 + $0x1d0] sm:$0xff]
    %v1856 = vld [vmem:[#allocation22 + $0x1d8] sm:$0xff]
    %v1857 = vld [vmem:[#allocation22 + $0x1e0] sm:$0xff]
    %v1858 = vld [vmem:[#allocation22 + $0x1e8] sm:$0xff]
    %v1859 = vld [vmem:[#allocation22 + $0x1f0] sm:$0xff]
    %v1860 = vld [vmem:[#allocation22 + $0x1f8] sm:$0xff]
    %v1861 = vld [vmem:[#allocation23] sm:$0x3]
    %v1863 = vlaneseq
    %v1864 = vshrl.u32 %v1863, 7
    %v1865 = vsub.s32 0, %v1864
    %v1866 = vrot.slane %v1861, %v1865
    %v1867 = vlaneseq
    %v1868 = vshrl.u32 %v1867, 7
    %v1869 = vsub.s32 1, %v1868
    %v1870 = vrot.slane %v1861, %v1869
    %v1937 = vunpack.c.l.b16 %v1797
    %v1938 = vunpack.c.h.b16 %v1797
    %v1939 = vunpack.c.l.b16 %v1798
    %v1940 = vunpack.c.h.b16 %v1798
    %v1941 = vunpack.c.l.b16 %v1799
    %v1942 = vunpack.c.h.b16 %v1799
    %v1943 = vunpack.c.l.b16 %v1800
    %v1944 = vunpack.c.h.b16 %v1800
    %v1945 = vunpack.c.l.b16 %v1801
    %v1946 = vunpack.c.h.b16 %v1801
    %v1947 = vunpack.c.l.b16 %v1802
    %v1948 = vunpack.c.h.b16 %v1802
    %v1949 = vunpack.c.l.b16 %v1803
    %v1950 = vunpack.c.h.b16 %v1803
    %v1951 = vunpack.c.l.b16 %v1804
    %v1952 = vunpack.c.h.b16 %v1804
    %v1953 = vunpack.c.l.b16 %v1805
    %v1954 = vunpack.c.h.b16 %v1805
    %v1955 = vunpack.c.l.b16 %v1806
    %v1956 = vunpack.c.h.b16 %v1806
    %v1957 = vunpack.c.l.b16 %v1807
    %v1958 = vunpack.c.h.b16 %v1807
    %v1959 = vunpack.c.l.b16 %v1808
    %v1960 = vunpack.c.h.b16 %v1808
    %v1961 = vunpack.c.l.b16 %v1809
    %v1962 = vunpack.c.h.b16 %v1809
    %v1963 = vunpack.c.l.b16 %v1810
    %v1964 = vunpack.c.h.b16 %v1810
    %v1965 = vunpack.c.l.b16 %v1811
    %v1966 = vunpack.c.h.b16 %v1811
    %v1967 = vunpack.c.l.b16 %v1812
    %v1968 = vunpack.c.h.b16 %v1812
    %v1969 = vunpack.c.l.b16 %v1813
    %v1970 = vunpack.c.h.b16 %v1813
    %v1971 = vunpack.c.l.b16 %v1814
    %v1972 = vunpack.c.h.b16 %v1814
    %v1973 = vunpack.c.l.b16 %v1815
    %v1974 = vunpack.c.h.b16 %v1815
    %v1975 = vunpack.c.l.b16 %v1816
    %v1976 = vunpack.c.h.b16 %v1816
    %v1977 = vunpack.c.l.b16 %v1817
    %v1978 = vunpack.c.h.b16 %v1817
    %v1979 = vunpack.c.l.b16 %v1818
    %v1980 = vunpack.c.h.b16 %v1818
    %v1981 = vunpack.c.l.b16 %v1819
    %v1982 = vunpack.c.h.b16 %v1819
    %v1983 = vunpack.c.l.b16 %v1820
    %v1984 = vunpack.c.h.b16 %v1820
    %v1985 = vunpack.c.l.b16 %v1821
    %v1986 = vunpack.c.h.b16 %v1821
    %v1987 = vunpack.c.l.b16 %v1822
    %v1988 = vunpack.c.h.b16 %v1822
    %v1989 = vunpack.c.l.b16 %v1823
    %v1990 = vunpack.c.h.b16 %v1823
    %v1991 = vunpack.c.l.b16 %v1824
    %v1992 = vunpack.c.h.b16 %v1824
    %v1993 = vunpack.c.l.b16 %v1825
    %v1994 = vunpack.c.h.b16 %v1825
    %v1995 = vunpack.c.l.b16 %v1826
    %v1996 = vunpack.c.h.b16 %v1826
    %v1997 = vunpack.c.l.b16 %v1827
    %v1998 = vunpack.c.h.b16 %v1827
    %v1999 = vunpack.c.l.b16 %v1828
    %v2000 = vunpack.c.h.b16 %v1828
    %v2001 = vunpack.c.l.b16 %v1829
    %v2002 = vunpack.c.h.b16 %v1829
    %v2003 = vunpack.c.l.b16 %v1830
    %v2004 = vunpack.c.h.b16 %v1830
    %v2005 = vunpack.c.l.b16 %v1831
    %v2006 = vunpack.c.h.b16 %v1831
    %v2007 = vunpack.c.l.b16 %v1832
    %v2008 = vunpack.c.h.b16 %v1832
    %v2009 = vunpack.c.l.b16 %v1833
    %v2010 = vunpack.c.h.b16 %v1833
    %v2011 = vunpack.c.l.b16 %v1834
    %v2012 = vunpack.c.h.b16 %v1834
    %v2013 = vunpack.c.l.b16 %v1835
    %v2014 = vunpack.c.h.b16 %v1835
    %v2015 = vunpack.c.l.b16 %v1836
    %v2016 = vunpack.c.h.b16 %v1836
    %v2017 = vunpack.c.l.b16 %v1837
    %v2018 = vunpack.c.h.b16 %v1837
    %v2019 = vunpack.c.l.b16 %v1838
    %v2020 = vunpack.c.h.b16 %v1838
    %v2021 = vunpack.c.l.b16 %v1839
    %v2022 = vunpack.c.h.b16 %v1839
    %v2023 = vunpack.c.l.b16 %v1840
    %v2024 = vunpack.c.h.b16 %v1840
    %v2025 = vunpack.c.l.b16 %v1841
    %v2026 = vunpack.c.h.b16 %v1841
    %v2027 = vunpack.c.l.b16 %v1842
    %v2028 = vunpack.c.h.b16 %v1842
    %v2029 = vunpack.c.l.b16 %v1843
    %v2030 = vunpack.c.h.b16 %v1843
    %v2031 = vunpack.c.l.b16 %v1844
    %v2032 = vunpack.c.h.b16 %v1844
    %v2033 = vunpack.c.l.b16 %v1845
    %v2034 = vunpack.c.h.b16 %v1845
    %v2035 = vunpack.c.l.b16 %v1846
    %v2036 = vunpack.c.h.b16 %v1846
    %v2037 = vunpack.c.l.b16 %v1847
    %v2038 = vunpack.c.h.b16 %v1847
    %v2039 = vunpack.c.l.b16 %v1848
    %v2040 = vunpack.c.h.b16 %v1848
    %v2041 = vunpack.c.l.b16 %v1849
    %v2042 = vunpack.c.h.b16 %v1849
    %v2043 = vunpack.c.l.b16 %v1850
    %v2044 = vunpack.c.h.b16 %v1850
    %v2045 = vunpack.c.l.b16 %v1851
    %v2046 = vunpack.c.h.b16 %v1851
    %v2047 = vunpack.c.l.b16 %v1852
    %v2048 = vunpack.c.h.b16 %v1852
    %v2049 = vunpack.c.l.b16 %v1853
    %v2050 = vunpack.c.h.b16 %v1853
    %v2051 = vunpack.c.l.b16 %v1854
    %v2052 = vunpack.c.h.b16 %v1854
    %v2053 = vunpack.c.l.b16 %v1855
    %v2054 = vunpack.c.h.b16 %v1855
    %v2055 = vunpack.c.l.b16 %v1856
    %v2056 = vunpack.c.h.b16 %v1856
    %v2057 = vunpack.c.l.b16 %v1857
    %v2058 = vunpack.c.h.b16 %v1857
    %v2059 = vunpack.c.l.b16 %v1858
    %v2060 = vunpack.c.h.b16 %v1858
    %v2061 = vunpack.c.l.b16 %v1859
    %v2062 = vunpack.c.h.b16 %v1859
    %v2063 = vunpack.c.l.b16 %v1860
    %v2064 = vunpack.c.h.b16 %v1860
    %v2065 = vpack.c.b16 %v1939, %v1937
    %v2066 = vpack.c.b16 %v1940, %v1938
    %v2067 = vpack.c.b16 %v1943, %v1941
    %v2068 = vpack.c.b16 %v1944, %v1942
    %v2069 = vpack.c.b16 %v1947, %v1945
    %v2070 = vpack.c.b16 %v1948, %v1946
    %v2071 = vpack.c.b16 %v1951, %v1949
    %v2072 = vpack.c.b16 %v1952, %v1950
    %v2073 = vpack.c.b16 %v1955, %v1953
    %v2074 = vpack.c.b16 %v1956, %v1954
    %v2075 = vpack.c.b16 %v1959, %v1957
    %v2076 = vpack.c.b16 %v1960, %v1958
    %v2077 = vpack.c.b16 %v1963, %v1961
    %v2078 = vpack.c.b16 %v1964, %v1962
    %v2079 = vpack.c.b16 %v1967, %v1965
    %v2080 = vpack.c.b16 %v1968, %v1966
    %v2081 = vpack.c.b16 %v1971, %v1969
    %v2082 = vpack.c.b16 %v1972, %v1970
    %v2083 = vpack.c.b16 %v1975, %v1973
    %v2084 = vpack.c.b16 %v1976, %v1974
    %v2085 = vpack.c.b16 %v1979, %v1977
    %v2086 = vpack.c.b16 %v1980, %v1978
    %v2087 = vpack.c.b16 %v1983, %v1981
    %v2088 = vpack.c.b16 %v1984, %v1982
    %v2089 = vpack.c.b16 %v1987, %v1985
    %v2090 = vpack.c.b16 %v1988, %v1986
    %v2091 = vpack.c.b16 %v1991, %v1989
    %v2092 = vpack.c.b16 %v1992, %v1990
    %v2093 = vpack.c.b16 %v1995, %v1993
    %v2094 = vpack.c.b16 %v1996, %v1994
    %v2095 = vpack.c.b16 %v1999, %v1997
    %v2096 = vpack.c.b16 %v2000, %v1998
    %v2097 = vpack.c.b16 %v2003, %v2001
    %v2098 = vpack.c.b16 %v2004, %v2002
    %v2099 = vpack.c.b16 %v2007, %v2005
    %v2100 = vpack.c.b16 %v2008, %v2006
    %v2101 = vpack.c.b16 %v2011, %v2009
    %v2102 = vpack.c.b16 %v2012, %v2010
    %v2103 = vpack.c.b16 %v2015, %v2013
    %v2104 = vpack.c.b16 %v2016, %v2014
    %v2105 = vpack.c.b16 %v2019, %v2017
    %v2106 = vpack.c.b16 %v2020, %v2018
    %v2107 = vpack.c.b16 %v2023, %v2021
    %v2108 = vpack.c.b16 %v2024, %v2022
    %v2109 = vpack.c.b16 %v2027, %v2025
    %v2110 = vpack.c.b16 %v2028, %v2026
    %v2111 = vpack.c.b16 %v2031, %v2029
    %v2112 = vpack.c.b16 %v2032, %v2030
    %v2113 = vpack.c.b16 %v2035, %v2033
    %v2114 = vpack.c.b16 %v2036, %v2034
    %v2115 = vpack.c.b16 %v2039, %v2037
    %v2116 = vpack.c.b16 %v2040, %v2038
    %v2117 = vpack.c.b16 %v2043, %v2041
    %v2118 = vpack.c.b16 %v2044, %v2042
    %v2119 = vpack.c.b16 %v2047, %v2045
    %v2120 = vpack.c.b16 %v2048, %v2046
    %v2121 = vpack.c.b16 %v2051, %v2049
    %v2122 = vpack.c.b16 %v2052, %v2050
    %v2123 = vpack.c.b16 %v2055, %v2053
    %v2124 = vpack.c.b16 %v2056, %v2054
    %v2125 = vpack.c.b16 %v2059, %v2057
    %v2126 = vpack.c.b16 %v2060, %v2058
    %v2127 = vpack.c.b16 %v2063, %v2061
    %v2128 = vpack.c.b16 %v2064, %v2062
    %2193 = vmatprep.subr.bf16.mxu0 %v2066
    %2194 = vmatpush1.bf16.msra.mxu0 %v2065
    %2195 = vmatprep.subr.bf16.mxu0 %v2068
    %2196 = vmatpush1.bf16.msra.mxu0 %v2067
    %2197 = vmatprep.subr.bf16.mxu0 %v2070
    %2198 = vmatpush1.bf16.msra.mxu0 %v2069
    %2199 = vmatprep.subr.bf16.mxu0 %v2072
    %2200 = vmatpush1.bf16.msra.mxu0 %v2071
    %2201 = vmatprep.subr.bf16.mxu0 %v2074
    %2202 = vmatpush1.bf16.msra.mxu0 %v2073
    %2203 = vmatprep.subr.bf16.mxu0 %v2076
    %2204 = vmatpush1.bf16.msra.mxu0 %v2075
    %2205 = vmatprep.subr.bf16.mxu0 %v2078
    %2206 = vmatpush1.bf16.msra.mxu0 %v2077
    %2207 = vmatprep.subr.bf16.mxu0 %v2080
    %2208 = vmatpush1.bf16.msra.mxu0 %v2079
    %2209 = vmatprep.subr.bf16.mxu0 %v2082
    %2210 = vmatpush1.bf16.msra.mxu0 %v2081
    %2211 = vmatprep.subr.bf16.mxu0 %v2084
    %2212 = vmatpush1.bf16.msra.mxu0 %v2083
    %2213 = vmatprep.subr.bf16.mxu0 %v2086
    %2214 = vmatpush1.bf16.msra.mxu0 %v2085
    %2215 = vmatprep.subr.bf16.mxu0 %v2088
    %2216 = vmatpush1.bf16.msra.mxu0 %v2087
    %2217 = vmatprep.subr.bf16.mxu0 %v2090
    %2218 = vmatpush1.bf16.msra.mxu0 %v2089
    %2219 = vmatprep.subr.bf16.mxu0 %v2092
    %2220 = vmatpush1.bf16.msra.mxu0 %v2091
    %2221 = vmatprep.subr.bf16.mxu0 %v2094
    %2222 = vmatpush1.bf16.msra.mxu0 %v2093
    %2223 = vmatprep.subr.bf16.mxu0 %v2096
    %2224 = vmatpush1.bf16.msra.mxu0 %v2095
    %2225 = vmatprep.mubr.bf16.mxu0 %v1794
    %2226 = vmatmul.mubr.bf16.gmra.mrb[0].mxu0 %v1793
    %v2227 = vpop.f32.mrb[0].mxu0
    %v2228 = vadd.f32 %v1866, %v2227
    %v2229 = vpop.f32.mrb[0].mxu0
    %v2230 = vadd.f32 %v1870, %v2229
    %v2231 = vpop.f32.mrb[0].mxu0
    %v2232 = vpop.f32.mrb[0].mxu0
    %2233 = vdwg.mxu0
    %2234 = vmatprep.subr.bf16.mxu0 %v2098
    %2235 = vmatpush1.bf16.msra.mxu0 %v2097
    %2236 = vmatprep.subr.bf16.mxu0 %v2100
    %2237 = vmatpush1.bf16.msra.mxu0 %v2099
    %2238 = vmatprep.subr.bf16.mxu0 %v2102
    %2239 = vmatpush1.bf16.msra.mxu0 %v2101
    %2240 = vmatprep.subr.bf16.mxu0 %v2104
    %2241 = vmatpush1.bf16.msra.mxu0 %v2103
    %2242 = vmatprep.subr.bf16.mxu0 %v2106
    %2243 = vmatpush1.bf16.msra.mxu0 %v2105
    %2244 = vmatprep.subr.bf16.mxu0 %v2108
    %2245 = vmatpush1.bf16.msra.mxu0 %v2107
    %2246 = vmatprep.subr.bf16.mxu0 %v2110
    %2247 = vmatpush1.bf16.msra.mxu0 %v2109
    %2248 = vmatprep.subr.bf16.mxu0 %v2112
    %2249 = vmatpush1.bf16.msra.mxu0 %v2111
    %2250 = vmatprep.subr.bf16.mxu0 %v2114
    %2251 = vmatpush1.bf16.msra.mxu0 %v2113
    %2252 = vmatprep.subr.bf16.mxu0 %v2116
    %2253 = vmatpush1.bf16.msra.mxu0 %v2115
    %2254 = vmatprep.subr.bf16.mxu0 %v2118
    %2255 = vmatpush1.bf16.msra.mxu0 %v2117
    %2256 = vmatprep.subr.bf16.mxu0 %v2120
    %2257 = vmatpush1.bf16.msra.mxu0 %v2119
    %2258 = vmatprep.subr.bf16.mxu0 %v2122
    %2259 = vmatpush1.bf16.msra.mxu0 %v2121
    %2260 = vmatprep.subr.bf16.mxu0 %v2124
    %2261 = vmatpush1.bf16.msra.mxu0 %v2123
    %2262 = vmatprep.subr.bf16.mxu0 %v2126
    %2263 = vmatpush1.bf16.msra.mxu0 %v2125
    %2264 = vmatprep.subr.bf16.mxu0 %v2128
    %2265 = vmatpush1.bf16.msra.mxu0 %v2127
    %2266 = vmatprep.mubr.bf16.mxu0 %v1796
    %2267 = vmatmul.mubr.bf16.gmra.mrb[0].mxu0 %v1795
    %v2268 = vpop.f32.mrb[0].mxu0
    %v2269 = vadd.f32 %v2228, %v2268
    %v2270 = vpop.f32.mrb[0].mxu0
    %v2271 = vadd.f32 %v2230, %v2270
    %v2272 = vpop.f32.mrb[0].mxu0
    %v2273 = vpop.f32.mrb[0].mxu0
    %2274 = vdwg.mxu0
    %2275 = vst [vmem:[#allocation25] sm:$0xff] %v2269
    %2276 = vst [vmem:[#allocation25 + $0x8] sm:$0xff] %v2271
    // Predicated region
    $region114: #{_forward.1} parent=1 // pred_check
      _
    $region115: #{_forward.1} parent=1 // pred_check_branch
      %2278 = sbr.rel (0) target = $region117
    $region116: #{_forward.1} parent=1 // pred_region
      %s2280 = ssub.s32 256, 256
      %2281 = vsyncadd [#allocation4], %s2280
      %s2283 = sshll.u32 [#allocation25], 4
      %s2284 = int_to_ptr.vmem [resolvable:$true] %s2283
      %2286 = dma.vmem_to_hbm [thread:$0]  %s2284, 256, %s14, [#allocation4]
    $region117: #{_forward.1} parent=1 // pred_fallthru
      _
    // Predicated region
    $region118: #{_forward.1} parent=1 // pred_check
      _
    $region119: #{_forward.1} parent=1 // pred_check_branch
      %2288 = sbr.rel (0) target = $region121
    $region120: #{_forward.1} parent=1 // pred_region
      %2289 = dma.done [#allocation4], 256
    $region121: #{_forward.1} parent=1 // pred_fallthru
      _
    %2290 = vsyncpa [#allocation3], 1
    %2291 = vsyncpa [#allocation6], 1
    %2292 = vsyncpa [#allocation9], 1
    %2293 = vsyncpa [#allocation12], 1
    %2294 = vsyncpa [#allocation15], 1
    %2295 = vsyncpa [#allocation18], 1
    %2296 = vsyncpa [#allocation21], 1
    %2297 = vsyncpa [#allocation24], 1
    %2298 = vsyncpa [#allocation4], 1

</llo_original>
